<compile_context>
chip_gen: v5e
topology: v5e:2x2
jax: 0.10.0
libtpu: 0.0.40
codegen_flags: <defaults>
</compile_context>

<pallas_src>
import math
import functools

import numpy as np
import jax
import jax.numpy as jnp
from jax.experimental import pallas as pl
from jax.experimental.pallas import tpu as pltpu

# ---------------- model hyper-parameters (small, from the module) ----------
N = 16                     # number of graph nodes
DIM_H = 32                 # in_dim == out_dim == dim_h
NUM_HEADS = 4
HEAD_DIM = DIM_H // NUM_HEADS
NUM_ANGLES = 1
CLAMP = 5.0
BN_EPS = 1e-5

# ---------------- packed parameter-slab layout (single f32 input) ----------
C = DIM_H
COL_WCAT = 0                  # (C, 5C)  [Wq | Wq@P | Wk | Wk@P | Wv]
COL_W1 = COL_WCAT + 5 * C     # (C, 2C)
COL_PROWK = COL_W1 + 2 * C    # (H*D, 2N) constant row-perm for K_h.view(H,D,N)
COL_W2 = COL_PROWK + 2 * N    # (2C, C)
COL_PROWQ = COL_W2 + C        # (H*N, H*N) constant row-perm for Q_h.view(H,N,D)
SLAB_W = 384                  # lane-dense: multiple of 128 (>= COL_PROWQ + 64)
ROW_SREP = 2 * C              # (1, C)    repeat_interleave(softmax(S), 2)
ROW_BCAT = ROW_SREP + 1       # (1, 5C)   [bq | bq@P | 0 | 0 | 0]
ROW_B1 = ROW_BCAT + 1         # (1, 2C)
ROW_B2 = ROW_B1 + 1           # (1, C)
ROW_BN = ROW_B2 + 1           # (1, 4C)   [bn1_g | bn1_b | bn2_g | bn2_b]
SLAB_H = 72                   # rows padded to a multiple of 8


# ---------------------------------------------------------------------------
# Fused kernel: projection + rotation + dense MHA + residual/BN/FFN/BN
# ---------------------------------------------------------------------------
def gps_fused_kernel(x_ref, ang_ref, slab_ref, out_ref, *,
                     num_heads, head_dim, clamp, eps):
    n, c = x_ref.shape                  # (16, 32)
    h_, d = num_heads, head_dim         # 4, 8
    q_rows = h_ * n                     # 64 stacked Q (dest) rows
    k_rows = h_ * d                     # 32 stacked K (src) rows

    x = x_ref[...]

    # ---- parameter loads: static slices of the single packed slab ----------
    wcat = slab_ref[0:c, COL_WCAT:COL_WCAT + 5 * c]             # (32, 160)
    w1 = slab_ref[0:c, COL_W1:COL_W1 + 2 * c]                   # (32, 64)
    prow_k = slab_ref[0:k_rows, COL_PROWK:COL_PROWK + 2 * n]    # (32, 32)
    w2 = slab_ref[0:2 * c, COL_W2:COL_W2 + c]                   # (64, 32)
    prow_q = slab_ref[0:q_rows, COL_PROWQ:COL_PROWQ + q_rows]   # (64, 64)
    s_rep = slab_ref[ROW_SREP:ROW_SREP + 1, 0:c]                # (1, 32)
    bcat = slab_ref[ROW_BCAT:ROW_BCAT + 1, 0:5 * c]             # (1, 160)
    b1 = slab_ref[ROW_B1:ROW_B1 + 1, 0:2 * c]                   # (1, 64)
    b2 = slab_ref[ROW_B2:ROW_B2 + 1, 0:c]                       # (1, 32)
    bn1_g = slab_ref[ROW_BN:ROW_BN + 1, 0:c]
    bn1_b = slab_ref[ROW_BN:ROW_BN + 1, c:2 * c]
    bn2_g = slab_ref[ROW_BN:ROW_BN + 1, 2 * c:3 * c]
    bn2_b = slab_ref[ROW_BN:ROW_BN + 1, 3 * c:4 * c]

    # ---- fused [Q | Q2 | K | K2 | V] projection: one bf16 MXU matmul -------
    proj = (jnp.dot(x.astype(jnp.bfloat16), wcat.astype(jnp.bfloat16),
                    preferred_element_type=jnp.float32) + bcat)   # (16, 160)

    # ---- RoPE-like rotation: ONE theta / cos / sin (EUP) -------------------
    theta = jnp.dot(ang_ref[...], s_rep,
                    preferred_element_type=jnp.float32)            # (16, 32)
    cos_t = jnp.cos(theta)
    sin_t = jnp.sin(theta)
    q_rot = proj[:, 0:c] * cos_t + proj[:, c:2 * c] * sin_t        # (16, 32)
    k_rot = proj[:, 2 * c:3 * c] * cos_t + proj[:, 3 * c:4 * c] * sin_t
    v_h = proj[:, 4 * c:5 * c]                                     # (16, 32)

    # ---- PyTorch's raw .view() reinterpretations as constant matmuls -------
    #   dest (64, 8) : row 16*h + q holds Q_h.view(H, N, D)[h, q, :]
    #   src  (32,16) : row  8*h + e holds K_h.view(H, D, N)[h, e, :]
    # (exact 0/1 permutation matrices; no scratch copies / masked stores /
    #  in-kernel reshapes or transposes; MXU is otherwise idle here.)
    dest = jnp.dot(prow_q[:, 0:n], q_rot[:, 0:d],
                   preferred_element_type=jnp.float32)
    for i in range(1, c // d):
        dest = dest + jnp.dot(prow_q[:, i * n:(i + 1) * n],
                              q_rot[:, i * d:(i + 1) * d],
                              preferred_element_type=jnp.float32)   # (64, 8)
    src = jnp.dot(prow_k[:, 0:n], k_rot[:, 0:n],
                  preferred_element_type=jnp.float32)
    for f in range(1, c // n):
        src = src + jnp.dot(prow_k[:, f * n:(f + 1) * n],
                            k_rot[:, f * n:(f + 1) * n],
                            preferred_element_type=jnp.float32)     # (32, 16)

    # ---- per-head dense dot-product attention (f32) ------------------------
    # Only the 4 valid 16x16 blocks are computed: no block-diagonal mask, no
    # wasted exp/sum over off-diagonal blocks.
    scale = 1.0 / math.sqrt(d)
    msgs = []
    for head in range(h_):
        dest_h = dest[head * n:(head + 1) * n, :]       # (16, 8)
        src_h = src[head * d:(head + 1) * d, :]         # (8, 16)
        score = jnp.dot(dest_h, src_h,
                        preferred_element_type=jnp.float32) * scale
        score = jnp.clip(score, -clamp, clamp)
        # Row-max skipped ONLY because scores are clipped to [-clamp, clamp];
        # exp cannot overflow.  Exact division (no approx reciprocal).
        p_att = jnp.exp(score)
        p_att = p_att / jnp.sum(p_att, axis=-1, keepdims=True)
        msgs.append(jnp.dot(p_att, v_h[:, head * d:(head + 1) * d],
                            preferred_element_type=jnp.float32))
    # messages emerge in natural node order -> no sigma/permmat un-permutation
    wv = jnp.concatenate(msgs, axis=1)                  # (16, 32)

    # ---- residual + BatchNorm1d (training stats) + FFN + residual + BN -----
    h_attn = x + wv                                     # dropout(p=0) identity
    mean1 = jnp.mean(h_attn, axis=0, keepdims=True)
    var1 = jnp.mean((h_attn - mean1) ** 2, axis=0, keepdims=True)
    h1 = (h_attn - mean1) * jax.lax.rsqrt(var1 + eps) * bn1_g + bn1_b

    ff = jnp.dot(h1.astype(jnp.bfloat16), w1.astype(jnp.bfloat16),
                 preferred_element_type=jnp.float32) + b1
    ff = jnp.maximum(ff, 0.0)                           # act = relu
    ff = jnp.dot(ff.astype(jnp.bfloat16), w2.astype(jnp.bfloat16),
                 preferred_element_type=jnp.float32) + b2
    h2 = h1 + ff                                        # ff_dropouts(p=0) identity

    mean2 = jnp.mean(h2, axis=0, keepdims=True)
    var2 = jnp.mean((h2 - mean2) ** 2, axis=0, keepdims=True)
    out_ref[...] = (h2 - mean2) * jax.lax.rsqrt(var2 + eps) * bn2_g + bn2_b


# ---------------------------------------------------------------------------
# Wrapper: one pallas_call, no grid, everything VMEM-resident
# ---------------------------------------------------------------------------
@jax.jit
def gps_layer_forward(x, angles, pslab):
    kernel = functools.partial(gps_fused_kernel, num_heads=NUM_HEADS,
                               head_dim=HEAD_DIM, clamp=CLAMP, eps=BN_EPS)
    vmem_spec = pl.BlockSpec(memory_space=pltpu.MemorySpace.VMEM)
    return pl.pallas_call(
        kernel,
        out_shape=jax.ShapeDtypeStruct((N, DIM_H), jnp.float32),
        in_specs=[vmem_spec, vmem_spec, vmem_spec],
        out_specs=vmem_spec,
    )(x, angles, pslab)


# ---------------------------------------------------------------------------
# One-time parameter folding + packing (outside the kernel)
# ---------------------------------------------------------------------------
def build_param_slab(p):
    """Fold the stack([-odd, even]) rotation operand into the projection
    weights, build the two constant row permutations that reproduce PyTorch's
    .view() reinterpretations, and pack every parameter into one lane-dense
    f32 slab (single input DMA)."""
    H, D, C_, N_ = NUM_HEADS, HEAD_DIM, DIM_H, N
    assert C_ == H * D
    assert C_ % D == 0 and C_ % N_ == 0 and (N_ * D) % C_ == 0  # view alignment

    # signed permutation P with  q2 = (x@Wq + bq) @ P  == stack([-odd, even])
    perm = np.zeros((D, D), np.float32)
    j = np.arange(D // 2)
    perm[2 * j + 1, j] = -1.0          # first half  <- -odd
    perm[2 * j, j + D // 2] = 1.0      # second half <-  even
    pbig = np.kron(np.eye(H, dtype=np.float32), perm)            # (C, C)

    Wq = np.asarray(p['Wq'])
    bq = np.asarray(p['bq'])
    Wk = np.asarray(p['Wk'])
    Wv = np.asarray(p['Wv'])
    Wcat = np.concatenate([Wq, Wq @ pbig, Wk, Wk @ pbig, Wv], axis=1)  # (C,5C)
    bcat = np.concatenate([bq, bq @ pbig,
                           np.zeros((1, 3 * C_), np.float32)], axis=1)

    s_sm = np.asarray(jax.nn.softmax(p['S'], axis=1))
    s_rep = np.repeat(s_sm, 2, axis=1)                            # (1, C)

    # Q_h.view(H, N, D): dest[H*n? ...] row r = N*h + q  <-  Qrot[node, chunk*D:]
    r = np.arange(H * N_)
    hq, nq = r // N_, r % N_
    flat_q = hq * (N_ * D) + nq * D
    node_q = flat_q // C_
    chunk_q = (flat_q % C_) // D
    perm_q = N_ * chunk_q + node_q
    prow_q = np.eye(H * N_, dtype=np.float32)[perm_q]             # (64, 64)

    # K_h.view(H, D, N): src row s = D*h + e  <-  Krot[node, half*N:]
    s = np.arange(H * D)
    hk, dk = s // D, s % D
    flat_k = hk * (N_ * D) + dk * N_
    node_k = flat_k // C_
    half_k = (flat_k % C_) // N_
    perm_k = N_ * half_k + node_k
    prow_k = np.eye((C_ // N_) * N_, dtype=np.float32)[perm_k]    # (32, 32)

    slab = np.zeros((SLAB_H, SLAB_W), np.float32)
    slab[0:C_, COL_WCAT:COL_WCAT + 5 * C_] = Wcat
    slab[0:C_, COL_W1:COL_W1 + 2 * C_] = np.asarray(p['W1'])
    slab[0:H * D, COL_PROWK:COL_PROWK + 2 * N_] = prow_k
    slab[0:2 * C_, COL_W2:COL_W2 + C_] = np.asarray(p['W2'])
    slab[0:H * N_, COL_PROWQ:COL_PROWQ + H * N_] = prow_q
    slab[ROW_SREP, 0:C_] = s_rep[0]
    slab[ROW_BCAT, 0:5 * C_] = bcat[0]
    slab[ROW_B1, 0:2 * C_] = np.asarray(p['b1'])[0]
    slab[ROW_B2, 0:C_] = np.asarray(p['b2'])[0]
    slab[ROW_BN, 0:C_] = np.asarray(p['bn1_g'])[0]
    slab[ROW_BN, C_:2 * C_] = np.asarray(p['bn1_b'])[0]
    slab[ROW_BN, 2 * C_:3 * C_] = np.asarray(p['bn2_g'])[0]
    slab[ROW_BN, 3 * C_:4 * C_] = np.asarray(p['bn2_b'])[0]
    return jnp.asarray(slab)


# ---------------------------------------------------------------------------
# Deterministic parameter init (shapes from the module's __init__)
# ---------------------------------------------------------------------------
def xavier_normal(key, shape, fan_in, fan_out):
    std = math.sqrt(2.0 / (fan_in + fan_out))
    return std * jax.random.normal(key, shape, dtype=jnp.float32)


def init_params(key):
    dh, hd, half = DIM_H, NUM_HEADS * HEAD_DIM, (NUM_HEADS * HEAD_DIM) // 2
    ks = jax.random.split(key, 10)
    bound_q = 1.0 / math.sqrt(dh)
    bound_f1 = 1.0 / math.sqrt(dh)
    bound_f2 = 1.0 / math.sqrt(2 * dh)
    return dict(
        Wq=xavier_normal(ks[0], (dh, hd), dh, hd),
        bq=jax.random.uniform(ks[1], (1, hd), jnp.float32, -bound_q, bound_q),
        Wk=xavier_normal(ks[2], (dh, hd), dh, hd),
        Wv=xavier_normal(ks[3], (dh, hd), dh, hd),
        S=xavier_normal(ks[4], (NUM_ANGLES, half), NUM_ANGLES, half),
        W1=jax.random.uniform(ks[5], (dh, 2 * dh), jnp.float32, -bound_f1, bound_f1),
        b1=jax.random.uniform(ks[6], (1, 2 * dh), jnp.float32, -bound_f1, bound_f1),
        W2=jax.random.uniform(ks[7], (2 * dh, dh), jnp.float32, -bound_f2, bound_f2),
        b2=jax.random.uniform(ks[8], (1, dh), jnp.float32, -bound_f2, bound_f2),
        bn1_g=jnp.ones((1, dh), jnp.float32), bn1_b=jnp.zeros((1, dh), jnp.float32),
        bn2_g=jnp.ones((1, dh), jnp.float32), bn2_b=jnp.zeros((1, dh), jnp.float32),
    )


# ---------------------------------------------------------------------------
# Plain-JAX reference (direct transcription of the PyTorch forward).
# matmul_dtype lets us also build a precision-matched reference that rounds
# the same (projection / FFN) matmul operands to bf16 as the kernel does.
# ---------------------------------------------------------------------------
def reference_forward(x, angles, p, matmul_dtype=jnp.float32):
    n, dh = x.shape
    h_, d_ = NUM_HEADS, HEAD_DIM

    def mm(a, b):
        return jnp.dot(a.astype(matmul_dtype), b.astype(matmul_dtype),
                       preferred_element_type=jnp.float32)

    s_sm = jax.nn.softmax(p['S'], axis=1)
    theta = jnp.repeat(angles @ s_sm, 2, axis=1)
    qh = mm(x, p['Wq']) + p['bq']
    kh = mm(x, p['Wk'])
    vh = mm(x, p['Wv'])
    Q = qh.reshape(n, h_, d_)
    K = kh.reshape(n, h_, d_)
    cos3 = jnp.cos(theta).reshape(n, h_, d_)
    sin3 = jnp.sin(theta).reshape(n, h_, d_)
    q2 = jnp.concatenate([-Q[..., 1::2], Q[..., 0::2]], axis=-1)
    k2 = jnp.concatenate([-K[..., 1::2], K[..., 0::2]], axis=-1)
    Qr = Q * cos3 + q2 * sin3
    Kr = K * cos3 + k2 * sin3
    dest = Qr.reshape(h_, n, d_)
    src = Kr.reshape(h_, d_, n)
    score = jnp.einsum('hnd,hdm->hnm', dest, src) / (d_ ** 0.5)
    score = jnp.clip(score, -CLAMP, CLAMP)
    score = jax.nn.softmax(score, axis=-1)
    msg = jnp.einsum('hnm,hmd->hnd', score,
                     vh.reshape(n, h_, d_).transpose(1, 0, 2))
    wv = msg.transpose(1, 0, 2).reshape(n, dh)

    def bn(z, g, b):
        m = z.mean(0, keepdims=True)
        v = ((z - m) ** 2).mean(0, keepdims=True)
        return (z - m) / jnp.sqrt(v + BN_EPS) * g + b

    h = bn(x + wv, p['bn1_g'], p['bn1_b'])
    ff = mm(jnp.maximum(mm(h, p['W1']) + p['b1'], 0.0), p['W2']) + p['b2']
    h = h + ff
    return bn(h, p['bn2_g'], p['bn2_b'])


if __name__ == "__main__":
    key = jax.random.PRNGKey(0)
    k_x, k_a, k_p = jax.random.split(key, 3)
    x = jax.random.normal(k_x, (N, DIM_H), dtype=jnp.float32)
    node_rotation_angles = 0.5 * jax.random.normal(k_a, (N, NUM_ANGLES),
                                                   dtype=jnp.float32)
    params = init_params(k_p)
    pslab = build_param_slab(params)

    out = gps_layer_forward(x, node_rotation_angles, pslab)
    out = jax.block_until_ready(out)
    assert out.shape == (N, DIM_H)

    # (1) implementation check vs. a reference that rounds the SAME matmul
    #     operands (projection + FFN) to bf16 -> must match tightly.
    ref_bf16 = reference_forward(x, node_rotation_angles, params,
                                 matmul_dtype=jnp.bfloat16)
    err_impl = float(jnp.max(jnp.abs(out - ref_bf16)))
    # (2) semantic check vs. the exact f32 transcription of the module; the
    #     only intended deviation is bf16 rounding of the projection / FFN
    #     matmul operands (outputs are batch-normalised -> unit scale).
    ref_f32 = reference_forward(x, node_rotation_angles, params,
                                matmul_dtype=jnp.float32)
    err_sem = float(jnp.max(jnp.abs(out - ref_f32)))

    assert err_impl < 5e-3, f"Pallas vs matched-precision reference: {err_impl}"
    assert err_sem < 1e-1, f"Pallas vs exact f32 reference: {err_sem}"
    print("KERNEL_OK")
</pallas_src>

<mosaic_0001>
module attributes {stable_mosaic.version = 11 : i64} {
  func.func @gps_fused_kernel(%arg0: memref<16x32xf32, #tpu.memory_space<vmem>>, %arg1: memref<16x1xf32, #tpu.memory_space<vmem>>, %arg2: memref<72x384xf32, #tpu.memory_space<vmem>>, %arg3: memref<16x32xf32, #tpu.memory_space<vmem>>) attributes {dimension_semantics = [], scalar_prefetch = 0 : i64, scratch_operands = 0 : i64, tpu.core_type = #tpu.core_type<tc>} {
    %c0 = arith.constant 0 : index
    %c0_0 = arith.constant 0 : index
    %0 = vector.load %arg0[%c0, %c0_0] : memref<16x32xf32, #tpu.memory_space<vmem>>, vector<16x32xf32>
    %c0_1 = arith.constant 0 : index
    %c0_2 = arith.constant 0 : index
    %1 = vector.load %arg2[%c0_1, %c0_2] : memref<72x384xf32, #tpu.memory_space<vmem>>, vector<32x160xf32>
    %c0_3 = arith.constant 0 : index
    %c160 = arith.constant 160 : index
    %2 = vector.load %arg2[%c0_3, %c160] : memref<72x384xf32, #tpu.memory_space<vmem>>, vector<32x64xf32>
    %c0_4 = arith.constant 0 : index
    %c224 = arith.constant 224 : index
    %3 = vector.load %arg2[%c0_4, %c224] : memref<72x384xf32, #tpu.memory_space<vmem>>, vector<32x32xf32>
    %c0_5 = arith.constant 0 : index
    %c256 = arith.constant 256 : index
    %4 = vector.load %arg2[%c0_5, %c256] : memref<72x384xf32, #tpu.memory_space<vmem>>, vector<64x32xf32>
    %c0_6 = arith.constant 0 : index
    %c288 = arith.constant 288 : index
    %5 = vector.load %arg2[%c0_6, %c288] : memref<72x384xf32, #tpu.memory_space<vmem>>, vector<64x64xf32>
    %c64 = arith.constant 64 : index
    %c0_7 = arith.constant 0 : index
    %6 = vector.load %arg2[%c64, %c0_7] : memref<72x384xf32, #tpu.memory_space<vmem>>, vector<1x32xf32>
    %c65 = arith.constant 65 : index
    %c0_8 = arith.constant 0 : index
    %7 = vector.load %arg2[%c65, %c0_8] : memref<72x384xf32, #tpu.memory_space<vmem>>, vector<1x160xf32>
    %c66 = arith.constant 66 : index
    %c0_9 = arith.constant 0 : index
    %8 = vector.load %arg2[%c66, %c0_9] : memref<72x384xf32, #tpu.memory_space<vmem>>, vector<1x64xf32>
    %c67 = arith.constant 67 : index
    %c0_10 = arith.constant 0 : index
    %9 = vector.load %arg2[%c67, %c0_10] : memref<72x384xf32, #tpu.memory_space<vmem>>, vector<1x32xf32>
    %c68 = arith.constant 68 : index
    %c0_11 = arith.constant 0 : index
    %10 = vector.load %arg2[%c68, %c0_11] : memref<72x384xf32, #tpu.memory_space<vmem>>, vector<1x32xf32>
    %c68_12 = arith.constant 68 : index
    %c32 = arith.constant 32 : index
    %11 = vector.load %arg2[%c68_12, %c32] : memref<72x384xf32, #tpu.memory_space<vmem>>, vector<1x32xf32>
    %c68_13 = arith.constant 68 : index
    %c64_14 = arith.constant 64 : index
    %12 = vector.load %arg2[%c68_13, %c64_14] : memref<72x384xf32, #tpu.memory_space<vmem>>, vector<1x32xf32>
    %c68_15 = arith.constant 68 : index
    %c96 = arith.constant 96 : index
    %13 = vector.load %arg2[%c68_15, %c96] : memref<72x384xf32, #tpu.memory_space<vmem>>, vector<1x32xf32>
    %14 = arith.truncf %0 : vector<16x32xf32> to vector<16x32xbf16>
    %15 = arith.truncf %1 : vector<32x160xf32> to vector<32x160xbf16>
    %cst = arith.constant dense<0.000000e+00> : vector<16x160xf32>
    %16 = tpu.matmul %14, %15, %cst {dimension_numbers = #tpu.dot_dimension_numbers<[1], [0], [0], [1], [0, 0, 1, 1], [], []>} : vector<16x32xbf16>, vector<32x160xbf16>, vector<16x160xf32> -> vector<16x160xf32>
    %17 = vector.broadcast %7 : vector<1x160xf32> to vector<16x160xf32>
    %18 = arith.addf %16, %17 : vector<16x160xf32>
    %c0_16 = arith.constant 0 : index
    %c0_17 = arith.constant 0 : index
    %19 = vector.load %arg1[%c0_16, %c0_17] : memref<16x1xf32, #tpu.memory_space<vmem>>, vector<16x1xf32>
    %cst_18 = arith.constant dense<0.000000e+00> : vector<16x32xf32>
    %20 = tpu.matmul %19, %6, %cst_18 {dimension_numbers = #tpu.dot_dimension_numbers<[1], [0], [0], [1], [0, 0, 1, 1], [], []>} : vector<16x1xf32>, vector<1x32xf32>, vector<16x32xf32> -> vector<16x32xf32>
    %21 = math.cos %20 : vector<16x32xf32>
    %22 = math.sin %20 : vector<16x32xf32>
    %23 = vector.extract_strided_slice %18 {offsets = [0, 0], sizes = [16, 32], strides = [1, 1]} : vector<16x160xf32> to vector<16x32xf32>
    %24 = arith.mulf %23, %21 : vector<16x32xf32>
    %25 = vector.extract_strided_slice %18 {offsets = [0, 32], sizes = [16, 32], strides = [1, 1]} : vector<16x160xf32> to vector<16x32xf32>
    %26 = arith.mulf %25, %22 : vector<16x32xf32>
    %27 = arith.addf %24, %26 : vector<16x32xf32>
    %28 = vector.extract_strided_slice %18 {offsets = [0, 64], sizes = [16, 32], strides = [1, 1]} : vector<16x160xf32> to vector<16x32xf32>
    %29 = arith.mulf %28, %21 : vector<16x32xf32>
    %30 = vector.extract_strided_slice %18 {offsets = [0, 96], sizes = [16, 32], strides = [1, 1]} : vector<16x160xf32> to vector<16x32xf32>
    %31 = arith.mulf %30, %22 : vector<16x32xf32>
    %32 = arith.addf %29, %31 : vector<16x32xf32>
    %33 = vector.extract_strided_slice %18 {offsets = [0, 128], sizes = [16, 32], strides = [1, 1]} : vector<16x160xf32> to vector<16x32xf32>
    %34 = vector.extract_strided_slice %5 {offsets = [0, 0], sizes = [64, 16], strides = [1, 1]} : vector<64x64xf32> to vector<64x16xf32>
    %35 = vector.extract_strided_slice %27 {offsets = [0, 0], sizes = [16, 8], strides = [1, 1]} : vector<16x32xf32> to vector<16x8xf32>
    %cst_19 = arith.constant dense<0.000000e+00> : vector<64x8xf32>
    %36 = tpu.matmul %34, %35, %cst_19 {dimension_numbers = #tpu.dot_dimension_numbers<[1], [0], [0], [1], [0, 0, 1, 1], [], []>} : vector<64x16xf32>, vector<16x8xf32>, vector<64x8xf32> -> vector<64x8xf32>
    %37 = vector.extract_strided_slice %5 {offsets = [0, 16], sizes = [64, 16], strides = [1, 1]} : vector<64x64xf32> to vector<64x16xf32>
    %38 = vector.extract_strided_slice %27 {offsets = [0, 8], sizes = [16, 8], strides = [1, 1]} : vector<16x32xf32> to vector<16x8xf32>
    %cst_20 = arith.constant dense<0.000000e+00> : vector<64x8xf32>
    %39 = tpu.matmul %37, %38, %cst_20 {dimension_numbers = #tpu.dot_dimension_numbers<[1], [0], [0], [1], [0, 0, 1, 1], [], []>} : vector<64x16xf32>, vector<16x8xf32>, vector<64x8xf32> -> vector<64x8xf32>
    %40 = arith.addf %36, %39 : vector<64x8xf32>
    %41 = vector.extract_strided_slice %5 {offsets = [0, 32], sizes = [64, 16], strides = [1, 1]} : vector<64x64xf32> to vector<64x16xf32>
    %42 = vector.extract_strided_slice %27 {offsets = [0, 16], sizes = [16, 8], strides = [1, 1]} : vector<16x32xf32> to vector<16x8xf32>
    %cst_21 = arith.constant dense<0.000000e+00> : vector<64x8xf32>
    %43 = tpu.matmul %41, %42, %cst_21 {dimension_numbers = #tpu.dot_dimension_numbers<[1], [0], [0], [1], [0, 0, 1, 1], [], []>} : vector<64x16xf32>, vector<16x8xf32>, vector<64x8xf32> -> vector<64x8xf32>
    %44 = arith.addf %40, %43 : vector<64x8xf32>
    %45 = vector.extract_strided_slice %5 {offsets = [0, 48], sizes = [64, 16], strides = [1, 1]} : vector<64x64xf32> to vector<64x16xf32>
    %46 = vector.extract_strided_slice %27 {offsets = [0, 24], sizes = [16, 8], strides = [1, 1]} : vector<16x32xf32> to vector<16x8xf32>
    %cst_22 = arith.constant dense<0.000000e+00> : vector<64x8xf32>
    %47 = tpu.matmul %45, %46, %cst_22 {dimension_numbers = #tpu.dot_dimension_numbers<[1], [0], [0], [1], [0, 0, 1, 1], [], []>} : vector<64x16xf32>, vector<16x8xf32>, vector<64x8xf32> -> vector<64x8xf32>
    %48 = arith.addf %44, %47 : vector<64x8xf32>
    %49 = vector.extract_strided_slice %3 {offsets = [0, 0], sizes = [32, 16], strides = [1, 1]} : vector<32x32xf32> to vector<32x16xf32>
    %50 = vector.extract_strided_slice %32 {offsets = [0, 0], sizes = [16, 16], strides = [1, 1]} : vector<16x32xf32> to vector<16x16xf32>
    %cst_23 = arith.constant dense<0.000000e+00> : vector<32x16xf32>
    %51 = tpu.matmul %49, %50, %cst_23 {dimension_numbers = #tpu.dot_dimension_numbers<[1], [0], [0], [1], [0, 0, 1, 1], [], []>} : vector<32x16xf32>, vector<16x16xf32>, vector<32x16xf32> -> vector<32x16xf32>
    %52 = vector.extract_strided_slice %3 {offsets = [0, 16], sizes = [32, 16], strides = [1, 1]} : vector<32x32xf32> to vector<32x16xf32>
    %53 = vector.extract_strided_slice %32 {offsets = [0, 16], sizes = [16, 16], strides = [1, 1]} : vector<16x32xf32> to vector<16x16xf32>
    %cst_24 = arith.constant dense<0.000000e+00> : vector<32x16xf32>
    %54 = tpu.matmul %52, %53, %cst_24 {dimension_numbers = #tpu.dot_dimension_numbers<[1], [0], [0], [1], [0, 0, 1, 1], [], []>} : vector<32x16xf32>, vector<16x16xf32>, vector<32x16xf32> -> vector<32x16xf32>
    %55 = arith.addf %51, %54 : vector<32x16xf32>
    %56 = vector.extract_strided_slice %48 {offsets = [0, 0], sizes = [16, 8], strides = [1, 1]} : vector<64x8xf32> to vector<16x8xf32>
    %57 = vector.extract_strided_slice %55 {offsets = [0, 0], sizes = [8, 16], strides = [1, 1]} : vector<32x16xf32> to vector<8x16xf32>
    %cst_25 = arith.constant dense<0.000000e+00> : vector<16x16xf32>
    %58 = tpu.matmul %56, %57, %cst_25 {dimension_numbers = #tpu.dot_dimension_numbers<[1], [0], [0], [1], [0, 0, 1, 1], [], []>} : vector<16x8xf32>, vector<8x16xf32>, vector<16x16xf32> -> vector<16x16xf32>
    %cst_26 = arith.constant 0.353553385 : f32
    %59 = vector.broadcast %cst_26 : f32 to vector<16x16xf32>
    %60 = arith.mulf %58, %59 : vector<16x16xf32>
    %cst_27 = arith.constant -5.000000e+00 : f32
    %cst_28 = arith.constant 5.000000e+00 : f32
    %61 = vector.broadcast %cst_27 : f32 to vector<16x16xf32>
    %62 = arith.maximumf %61, %60 : vector<16x16xf32>
    %63 = vector.broadcast %cst_28 : f32 to vector<16x16xf32>
    %64 = arith.minimumf %63, %62 : vector<16x16xf32>
    %65 = math.exp %64 : vector<16x16xf32>
    %cst_29 = arith.constant dense<0.000000e+00> : vector<16xf32>
    %66 = vector.multi_reduction <add>, %65, %cst_29 [1] : vector<16x16xf32> to vector<16xf32>
    %67 = vector.shape_cast %66 : vector<16xf32> to vector<16x1xf32>
    %68 = vector.broadcast %67 : vector<16x1xf32> to vector<16x16xf32>
    %69 = arith.divf %65, %68 : vector<16x16xf32>
    %70 = vector.extract_strided_slice %33 {offsets = [0, 0], sizes = [16, 8], strides = [1, 1]} : vector<16x32xf32> to vector<16x8xf32>
    %cst_30 = arith.constant dense<0.000000e+00> : vector<16x8xf32>
    %71 = tpu.matmul %69, %70, %cst_30 {dimension_numbers = #tpu.dot_dimension_numbers<[1], [0], [0], [1], [0, 0, 1, 1], [], []>} : vector<16x16xf32>, vector<16x8xf32>, vector<16x8xf32> -> vector<16x8xf32>
    %72 = vector.extract_strided_slice %48 {offsets = [16, 0], sizes = [16, 8], strides = [1, 1]} : vector<64x8xf32> to vector<16x8xf32>
    %73 = vector.extract_strided_slice %55 {offsets = [8, 0], sizes = [8, 16], strides = [1, 1]} : vector<32x16xf32> to vector<8x16xf32>
    %cst_31 = arith.constant dense<0.000000e+00> : vector<16x16xf32>
    %74 = tpu.matmul %72, %73, %cst_31 {dimension_numbers = #tpu.dot_dimension_numbers<[1], [0], [0], [1], [0, 0, 1, 1], [], []>} : vector<16x8xf32>, vector<8x16xf32>, vector<16x16xf32> -> vector<16x16xf32>
    %cst_32 = arith.constant 0.353553385 : f32
    %75 = vector.broadcast %cst_32 : f32 to vector<16x16xf32>
    %76 = arith.mulf %74, %75 : vector<16x16xf32>
    %cst_33 = arith.constant -5.000000e+00 : f32
    %cst_34 = arith.constant 5.000000e+00 : f32
    %77 = vector.broadcast %cst_33 : f32 to vector<16x16xf32>
    %78 = arith.maximumf %77, %76 : vector<16x16xf32>
    %79 = vector.broadcast %cst_34 : f32 to vector<16x16xf32>
    %80 = arith.minimumf %79, %78 : vector<16x16xf32>
    %81 = math.exp %80 : vector<16x16xf32>
    %cst_35 = arith.constant dense<0.000000e+00> : vector<16xf32>
    %82 = vector.multi_reduction <add>, %81, %cst_35 [1] : vector<16x16xf32> to vector<16xf32>
    %83 = vector.shape_cast %82 : vector<16xf32> to vector<16x1xf32>
    %84 = vector.broadcast %83 : vector<16x1xf32> to vector<16x16xf32>
    %85 = arith.divf %81, %84 : vector<16x16xf32>
    %86 = vector.extract_strided_slice %33 {offsets = [0, 8], sizes = [16, 8], strides = [1, 1]} : vector<16x32xf32> to vector<16x8xf32>
    %cst_36 = arith.constant dense<0.000000e+00> : vector<16x8xf32>
    %87 = tpu.matmul %85, %86, %cst_36 {dimension_numbers = #tpu.dot_dimension_numbers<[1], [0], [0], [1], [0, 0, 1, 1], [], []>} : vector<16x16xf32>, vector<16x8xf32>, vector<16x8xf32> -> vector<16x8xf32>
    %88 = vector.extract_strided_slice %48 {offsets = [32, 0], sizes = [16, 8], strides = [1, 1]} : vector<64x8xf32> to vector<16x8xf32>
    %89 = vector.extract_strided_slice %55 {offsets = [16, 0], sizes = [8, 16], strides = [1, 1]} : vector<32x16xf32> to vector<8x16xf32>
    %cst_37 = arith.constant dense<0.000000e+00> : vector<16x16xf32>
    %90 = tpu.matmul %88, %89, %cst_37 {dimension_numbers = #tpu.dot_dimension_numbers<[1], [0], [0], [1], [0, 0, 1, 1], [], []>} : vector<16x8xf32>, vector<8x16xf32>, vector<16x16xf32> -> vector<16x16xf32>
    %cst_38 = arith.constant 0.353553385 : f32
    %91 = vector.broadcast %cst_38 : f32 to vector<16x16xf32>
    %92 = arith.mulf %90, %91 : vector<16x16xf32>
    %cst_39 = arith.constant -5.000000e+00 : f32
    %cst_40 = arith.constant 5.000000e+00 : f32
    %93 = vector.broadcast %cst_39 : f32 to vector<16x16xf32>
    %94 = arith.maximumf %93, %92 : vector<16x16xf32>
    %95 = vector.broadcast %cst_40 : f32 to vector<16x16xf32>
    %96 = arith.minimumf %95, %94 : vector<16x16xf32>
    %97 = math.exp %96 : vector<16x16xf32>
    %cst_41 = arith.constant dense<0.000000e+00> : vector<16xf32>
    %98 = vector.multi_reduction <add>, %97, %cst_41 [1] : vector<16x16xf32> to vector<16xf32>
    %99 = vector.shape_cast %98 : vector<16xf32> to vector<16x1xf32>
    %100 = vector.broadcast %99 : vector<16x1xf32> to vector<16x16xf32>
    %101 = arith.divf %97, %100 : vector<16x16xf32>
    %102 = vector.extract_strided_slice %33 {offsets = [0, 16], sizes = [16, 8], strides = [1, 1]} : vector<16x32xf32> to vector<16x8xf32>
    %cst_42 = arith.constant dense<0.000000e+00> : vector<16x8xf32>
    %103 = tpu.matmul %101, %102, %cst_42 {dimension_numbers = #tpu.dot_dimension_numbers<[1], [0], [0], [1], [0, 0, 1, 1], [], []>} : vector<16x16xf32>, vector<16x8xf32>, vector<16x8xf32> -> vector<16x8xf32>
    %104 = vector.extract_strided_slice %48 {offsets = [48, 0], sizes = [16, 8], strides = [1, 1]} : vector<64x8xf32> to vector<16x8xf32>
    %105 = vector.extract_strided_slice %55 {offsets = [24, 0], sizes = [8, 16], strides = [1, 1]} : vector<32x16xf32> to vector<8x16xf32>
    %cst_43 = arith.constant dense<0.000000e+00> : vector<16x16xf32>
    %106 = tpu.matmul %104, %105, %cst_43 {dimension_numbers = #tpu.dot_dimension_numbers<[1], [0], [0], [1], [0, 0, 1, 1], [], []>} : vector<16x8xf32>, vector<8x16xf32>, vector<16x16xf32> -> vector<16x16xf32>
    %cst_44 = arith.constant 0.353553385 : f32
    %107 = vector.broadcast %cst_44 : f32 to vector<16x16xf32>
    %108 = arith.mulf %106, %107 : vector<16x16xf32>
    %cst_45 = arith.constant -5.000000e+00 : f32
    %cst_46 = arith.constant 5.000000e+00 : f32
    %109 = vector.broadcast %cst_45 : f32 to vector<16x16xf32>
    %110 = arith.maximumf %109, %108 : vector<16x16xf32>
    %111 = vector.broadcast %cst_46 : f32 to vector<16x16xf32>
    %112 = arith.minimumf %111, %110 : vector<16x16xf32>
    %113 = math.exp %112 : vector<16x16xf32>
    %cst_47 = arith.constant dense<0.000000e+00> : vector<16xf32>
    %114 = vector.multi_reduction <add>, %113, %cst_47 [1] : vector<16x16xf32> to vector<16xf32>
    %115 = vector.shape_cast %114 : vector<16xf32> to vector<16x1xf32>
    %116 = vector.broadcast %115 : vector<16x1xf32> to vector<16x16xf32>
    %117 = arith.divf %113, %116 : vector<16x16xf32>
    %118 = vector.extract_strided_slice %33 {offsets = [0, 24], sizes = [16, 8], strides = [1, 1]} : vector<16x32xf32> to vector<16x8xf32>
    %cst_48 = arith.constant dense<0.000000e+00> : vector<16x8xf32>
    %119 = tpu.matmul %117, %118, %cst_48 {dimension_numbers = #tpu.dot_dimension_numbers<[1], [0], [0], [1], [0, 0, 1, 1], [], []>} : vector<16x16xf32>, vector<16x8xf32>, vector<16x8xf32> -> vector<16x8xf32>
    %120 = tpu.concatenate %71, %87, %103, %119 in 1 : vector<16x8xf32>, vector<16x8xf32>, vector<16x8xf32>, vector<16x8xf32> -> vector<16x32xf32>
    %121 = arith.addf %0, %120 : vector<16x32xf32>
    %cst_49 = arith.constant dense<0.000000e+00> : vector<32xf32>
    %122 = vector.multi_reduction <add>, %121, %cst_49 [0] : vector<16x32xf32> to vector<32xf32>
    %123 = vector.shape_cast %122 : vector<32xf32> to vector<1x32xf32>
    %cst_50 = arith.constant 1.600000e+01 : f32
    %124 = vector.broadcast %cst_50 : f32 to vector<1x32xf32>
    %125 = arith.divf %123, %124 : vector<1x32xf32>
    %126 = vector.broadcast %125 : vector<1x32xf32> to vector<16x32xf32>
    %127 = arith.subf %121, %126 : vector<16x32xf32>
    %128 = arith.mulf %127, %127 : vector<16x32xf32>
    %cst_51 = arith.constant dense<0.000000e+00> : vector<32xf32>
    %129 = vector.multi_reduction <add>, %128, %cst_51 [0] : vector<16x32xf32> to vector<32xf32>
    %130 = vector.shape_cast %129 : vector<32xf32> to vector<1x32xf32>
    %cst_52 = arith.constant 1.600000e+01 : f32
    %131 = vector.broadcast %cst_52 : f32 to vector<1x32xf32>
    %132 = arith.divf %130, %131 : vector<1x32xf32>
    %133 = vector.broadcast %125 : vector<1x32xf32> to vector<16x32xf32>
    %134 = arith.subf %121, %133 : vector<16x32xf32>
    %cst_53 = arith.constant 9.99999974E-6 : f32
    %135 = vector.broadcast %cst_53 : f32 to vector<1x32xf32>
    %136 = arith.addf %132, %135 : vector<1x32xf32>
    %137 = math.rsqrt %136 : vector<1x32xf32>
    %138 = vector.broadcast %137 : vector<1x32xf32> to vector<16x32xf32>
    %139 = arith.mulf %134, %138 : vector<16x32xf32>
    %140 = vector.broadcast %10 : vector<1x32xf32> to vector<16x32xf32>
    %141 = arith.mulf %139, %140 : vector<16x32xf32>
    %142 = vector.broadcast %11 : vector<1x32xf32> to vector<16x32xf32>
    %143 = arith.addf %141, %142 : vector<16x32xf32>
    %144 = arith.truncf %143 : vector<16x32xf32> to vector<16x32xbf16>
    %145 = arith.truncf %2 : vector<32x64xf32> to vector<32x64xbf16>
    %cst_54 = arith.constant dense<0.000000e+00> : vector<16x64xf32>
    %146 = tpu.matmul %144, %145, %cst_54 {dimension_numbers = #tpu.dot_dimension_numbers<[1], [0], [0], [1], [0, 0, 1, 1], [], []>} : vector<16x32xbf16>, vector<32x64xbf16>, vector<16x64xf32> -> vector<16x64xf32>
    %147 = vector.broadcast %8 : vector<1x64xf32> to vector<16x64xf32>
    %148 = arith.addf %146, %147 : vector<16x64xf32>
    %cst_55 = arith.constant 0.000000e+00 : f32
    %149 = vector.broadcast %cst_55 : f32 to vector<16x64xf32>
    %150 = arith.maximumf %148, %149 : vector<16x64xf32>
    %151 = arith.truncf %150 : vector<16x64xf32> to vector<16x64xbf16>
    %152 = arith.truncf %4 : vector<64x32xf32> to vector<64x32xbf16>
    %cst_56 = arith.constant dense<0.000000e+00> : vector<16x32xf32>
    %153 = tpu.matmul %151, %152, %cst_56 {dimension_numbers = #tpu.dot_dimension_numbers<[1], [0], [0], [1], [0, 0, 1, 1], [], []>} : vector<16x64xbf16>, vector<64x32xbf16>, vector<16x32xf32> -> vector<16x32xf32>
    %154 = vector.broadcast %9 : vector<1x32xf32> to vector<16x32xf32>
    %155 = arith.addf %153, %154 : vector<16x32xf32>
    %156 = arith.addf %143, %155 : vector<16x32xf32>
    %cst_57 = arith.constant dense<0.000000e+00> : vector<32xf32>
    %157 = vector.multi_reduction <add>, %156, %cst_57 [0] : vector<16x32xf32> to vector<32xf32>
    %158 = vector.shape_cast %157 : vector<32xf32> to vector<1x32xf32>
    %cst_58 = arith.constant 1.600000e+01 : f32
    %159 = vector.broadcast %cst_58 : f32 to vector<1x32xf32>
    %160 = arith.divf %158, %159 : vector<1x32xf32>
    %161 = vector.broadcast %160 : vector<1x32xf32> to vector<16x32xf32>
    %162 = arith.subf %156, %161 : vector<16x32xf32>
    %163 = arith.mulf %162, %162 : vector<16x32xf32>
    %cst_59 = arith.constant dense<0.000000e+00> : vector<32xf32>
    %164 = vector.multi_reduction <add>, %163, %cst_59 [0] : vector<16x32xf32> to vector<32xf32>
    %165 = vector.shape_cast %164 : vector<32xf32> to vector<1x32xf32>
    %cst_60 = arith.constant 1.600000e+01 : f32
    %166 = vector.broadcast %cst_60 : f32 to vector<1x32xf32>
    %167 = arith.divf %165, %166 : vector<1x32xf32>
    %168 = vector.broadcast %160 : vector<1x32xf32> to vector<16x32xf32>
    %169 = arith.subf %156, %168 : vector<16x32xf32>
    %cst_61 = arith.constant 9.99999974E-6 : f32
    %170 = vector.broadcast %cst_61 : f32 to vector<1x32xf32>
    %171 = arith.addf %167, %170 : vector<1x32xf32>
    %172 = math.rsqrt %171 : vector<1x32xf32>
    %173 = vector.broadcast %172 : vector<1x32xf32> to vector<16x32xf32>
    %174 = arith.mulf %169, %173 : vector<16x32xf32>
    %175 = vector.broadcast %12 : vector<1x32xf32> to vector<16x32xf32>
    %176 = arith.mulf %174, %175 : vector<16x32xf32>
    %177 = vector.broadcast %13 : vector<1x32xf32> to vector<16x32xf32>
    %178 = arith.addf %176, %177 : vector<16x32xf32>
    %c0_62 = arith.constant 0 : index
    %c0_63 = arith.constant 0 : index
    %179 = vector.load %arg3[%c0_62, %c0_63] : memref<16x32xf32, #tpu.memory_space<vmem>>, vector<16x32xf32>
    tpu.vector_store %arg3[%c0_62, %c0_63], %178 {strides = array<i32>} : memref<16x32xf32, #tpu.memory_space<vmem>>, vector<16x32xf32>,
    return
  }
}

</mosaic_0001>

<llo_original>
// kernel: gps_layer_forward.1
$region0: #{gps_layer_forward.1}
  #allocation0 [shape = 'u32[]', space=smem, size = 0x4, offset = 0x4, fixed_abs, tag = 'smem constant byte address 0x4 - core index']
  #allocation1 [shape = 'u32[72,128]{1,0:T(1,128)}', space=vmem, size = 0x9000, scoped, tag = 'internal scratch']
  %s0 = inlined_call_operand.vmem [shape: f32[16,32], index: 0, kind: input, shape index: {}]
  %s1 = inlined_call_operand.vmem [shape: f32[16,1], index: 1, kind: input, shape index: {}]
  %s2 = inlined_call_operand.hbm [shape: f32[72,384], index: 2, kind: input, shape index: {}]
  %s3 = inlined_call_operand.hbm [shape: f32[16,32], index: 3, kind: output, shape index: {}]
  %s4 = sld [smem:[#allocation0]]
  $region26: #{gps_layer_forward.1} parent=0
    _
  %s6 = ssub.s32 1, %s4
  %s7 = scalar_select 0, %s6, %s4
  $region1: #{gps_layer_forward.1} parent=0
    #allocation2 [shape = 'u8[110592]{0}', space=vmem, size = 0x1b000, scoped, tag = 'input window, operand 2, single buffered']
    #allocation3 [shape = 's32[1]{0}', space=sflag, size = 0x4, scoped, tag = 'scoped memory for gps_layer_forward.1']
    #allocation4 [shape = 's32[1]{0}', space=sflag, size = 0x4, scoped, tag = 'scoped memory for gps_layer_forward.1']
    #allocation5 [shape = 'u8[8192]{0}', space=vmem, size = 0x2000, scoped, tag = 'output window, operand 0, single buffered']
    %8 = vsyncpa [#allocation3], 0
    %9 = vsyncpa [#allocation4], 0
    // Predicated region
    $region2: #{gps_layer_forward.1} parent=1 // pred_check
      _
    $region3: #{gps_layer_forward.1} parent=1 // pred_check_branch
      %11 = sbr.rel (0) target = $region5
    $region4: #{gps_layer_forward.1} parent=1 // pred_region
      _
    $region5: #{gps_layer_forward.1} parent=1 // pred_fallthru
      _
    // Predicated region
    $region6: #{gps_layer_forward.1} parent=1 // pred_check
      _
    $region7: #{gps_layer_forward.1} parent=1 // pred_check_branch
      %13 = sbr.rel (0) target = $region9
    $region8: #{gps_layer_forward.1} parent=1 // pred_region
      _
    $region9: #{gps_layer_forward.1} parent=1 // pred_fallthru
      _
    // Predicated region
    $region10: #{gps_layer_forward.1} parent=1 // pred_check
      _
    $region11: #{gps_layer_forward.1} parent=1 // pred_check_branch
      %15 = sbr.rel (0) target = $region13
    $region12: #{gps_layer_forward.1} parent=1 // pred_region
      %17 = vsyncadd [#allocation3], 0
      %s18 = sshll.u32 %s2, 4
      %s19 = int_to_ptr.hbm [resolvable:$true] %s18
      %s20 = sshll.u32 [#allocation2], 4
      %s21 = int_to_ptr.vmem [resolvable:$true] %s20
      %26 = dma.hbm_to_vmem [thread:$0]  %s19, 3456, %s21, [#allocation3], 384, 384, 24
    $region13: #{gps_layer_forward.1} parent=1 // pred_fallthru
      _
    // Predicated region
    $region14: #{gps_layer_forward.1} parent=1 // pred_check
      _
    $region15: #{gps_layer_forward.1} parent=1 // pred_check_branch
      %28 = sbr.rel (0) target = $region17
    $region16: #{gps_layer_forward.1} parent=1 // pred_region
      %30 = dma.done [#allocation3], 3456
    $region17: #{gps_layer_forward.1} parent=1 // pred_fallthru
      _
    %v32 = vld [vmem:[%s0] sm:$0xff]
    %v33 = vld [vmem:[%s0 + $0x8] sm:$0xff]
    %v34 = vld [vmem:[#allocation2] sm:$0xff]
    %v35 = vld [vmem:[#allocation2 + $0x8] sm:$0xff]
    %v36 = vld [vmem:[#allocation2 + $0x18] sm:$0xff]
    %v37 = vld [vmem:[#allocation2 + $0x20] sm:$0xff]
    %v38 = vld [vmem:[#allocation2 + $0x30] sm:$0xff]
    %v39 = vld [vmem:[#allocation2 + $0x38] sm:$0xff]
    %v40 = vld [vmem:[#allocation2 + $0x48] sm:$0xff]
    %v41 = vld [vmem:[#allocation2 + $0x50] sm:$0xff]
    %v42 = vld [vmem:[#allocation2 + $0x10] sm:$0xff]
    %v43 = vld [vmem:[#allocation2 + $0x28] sm:$0xff]
    %v44 = vld [vmem:[#allocation2 + $0x40] sm:$0xff]
    %v45 = vld [vmem:[#allocation2 + $0x58] sm:$0xff]
    %v46 = vld [vmem:[#allocation2 + $0x70] sm:$0xff]
    %v47 = vld [vmem:[#allocation2 + $0x88] sm:$0xff]
    %v48 = vld [vmem:[#allocation2 + $0xa0] sm:$0xff]
    %v49 = vld [vmem:[#allocation2 + $0xb8] sm:$0xff]
    %v50 = vld [vmem:[#allocation2 + $0xc0] ss:$0 sm:$0xff]
    %s51 = scalar_lea.vmem [#allocation2], 193
    %v52 = vld [vmem:[%s51] ss:$8 sm:$0x3]
    %v53 = vld [vmem:[#allocation2 + $0xc2] ss:$0 sm:$0xff]
    %v54 = vld [vmem:[#allocation2 + $0xc3] ss:$0 sm:$0xff]
    %v55 = vld [vmem:[#allocation2 + $0xc4] ss:$0 sm:$0xff]
    %v56 = vpack.c.bf16 %v33, %v32
    %v57 = vpack.c.bf16 %v36, %v34
    %v58 = vpack.c.bf16 %v37, %v35
    %v59 = vpack.c.bf16 %v40, %v38
    %v60 = vpack.c.bf16 %v41, %v39
    %v62 = vperm.slane %v52, 0
    %v63 = vperm.slane %v52, 1
    %vm66 = vcmask 261120
    %v68 = vsel %vm66, %v56, 0
    %70 = vmatpush.bf16.msra.mxu0 0
    %71 = vmatpush.bf16.msra.mxu0 0
    %72 = vmatpush.bf16.msra.mxu0 0
    %73 = vmatpush.bf16.msra.mxu0 0
    %74 = vmatpush.bf16.msra.mxu0 0
    %75 = vmatpush.bf16.msra.mxu0 0
    %76 = vmatpush.bf16.msra.mxu0 %v59
    %77 = vmatpush.bf16.msra.mxu0 %v57
    %78 = vmatmul.bf16.gmra.mxu0 %v68
    %v79 = vpop.f32.mrf.mxu0
    %v80 = vadd.f32 %v62, %v79
    %v81 = vpop.f32.mrf.mxu0
    %v82 = vadd.f32 %v62, %v81
    %83 = vdwg.mxu0
    %84 = vmatpush.bf16.msra.mxu0 0
    %85 = vmatpush.bf16.msra.mxu0 0
    %86 = vmatpush.bf16.msra.mxu0 0
    %87 = vmatpush.bf16.msra.mxu0 0
    %88 = vmatpush.bf16.msra.mxu0 0
    %89 = vmatpush.bf16.msra.mxu0 0
    %90 = vmatpush.bf16.msra.mxu0 %v60
    %91 = vmatpush.bf16.msra.mxu0 %v58
    %92 = vmatmul.bf16.gmra.mxu0 %v68
    %v93 = vpop.f32.mrf.mxu0
    %v94 = vadd.f32 %v63, %v93
    %v95 = vpop.f32.mrf.mxu0
    %v96 = vadd.f32 %v63, %v95
    %97 = vdwg.mxu0
    %v98 = vld [vmem:[%s1] sm:$0xff]
    %v99 = vld [vmem:[%s1 + $0x8] sm:$0xff]
    %vm100 = vcmask 7168
    %v102 = vsel %vm100, %v98, 0
    %v105 = vsel %vm100, %v99, 0
    %vm107 = vcmask 1040384
    %v109 = vsel %vm107, %v50, 0
    %111 = vmatpush.msra.mxu0 0.0
    %112 = vmatpush.msra.mxu0 0.0
    %113 = vmatpush.msra.mxu0 0.0
    %114 = vmatpush.msra.mxu0 0.0
    %115 = vmatpush.msra.mxu0 0.0
    %116 = vmatpush.msra.mxu0 0.0
    %117 = vmatpush.msra.mxu0 0.0
    %118 = vmatpush.msra.mxu0 0.0
    %119 = vmatpush.msra.mxu0 0.0
    %120 = vmatpush.msra.mxu0 0.0
    %121 = vmatpush.msra.mxu0 0.0
    %122 = vmatpush.msra.mxu0 0.0
    %123 = vmatpush.msra.mxu0 0.0
    %124 = vmatpush.msra.mxu0 0.0
    %125 = vmatpush.msra.mxu0 0.0
    %126 = vmatpush.msra.mxu0 %v109
    %127 = vmatmul.f32.gmra.mxu0 %v102
    %v128 = vpop.f32.mrf.mxu0
    %v129 = vadd.f32 0.0, %v128
    %130 = vmatmul.f32.gmra.mxu0 %v105
    %v131 = vpop.f32.mrf.mxu0
    %v132 = vadd.f32 0.0, %v131
    %133 = vdwg.mxu0
    %v134 = vand.u32 2147483647, %v129
    %vm135 = vcmp.le.f32.partialorder %v134, 0.7853982
    %vm136 = vcmp.lt.s32.totalorder %v129, 0
    %v137 = vand.u32 %v129, 2139095040
    %v138 = vshrl.u32 %v137, 23
    %v139 = vsub.s32 %v138, 127
    %v140 = vand.u32 2147483647, %v129
    %v141 = vand.u32 %v140, 8388607
    %v142 = vor.u32 %v141, 8388608
    %v143 = vsub.s32 0, %v142
    %v144 = vadd.s32 %v139, 1
    %vm145 = vcmp.gt.s32.totalorder %v144, 0
    %v146 = vsel %vm145, %v144, 0
    %v147 = vshrl.u32 %v146, 5
    %v148 = vand.u32 %v146, 31
    %v149 = vsub.s32 32, %v148
    %v150 = vshrl.u32 683565275, %v149
    %v151 = vshll.u32 683565275, %v148
    %v152 = vshrl.u32 2475754826, %v149
    %v153 = vor.u32 %v151, %v152
    %v154 = vshll.u32 2475754826, %v148
    %v155 = vshrl.u32 2131351028, %v149
    %v156 = vor.u32 %v154, %v155
    %v157 = vshll.u32 2131351028, %v148
    %v158 = vshrl.u32 2102212464, %v149
    %v159 = vor.u32 %v157, %v158
    %v160 = vshll.u32 2102212464, %v148
    %v161 = vshrl.u32 920167782, %v149
    %v162 = vor.u32 %v160, %v161
    %v163 = vshll.u32 920167782, %v148
    %v164 = vshrl.u32 1326507024, %v149
    %v165 = vor.u32 %v163, %v164
    %vm166 = vcmp.lt.s32.totalorder %v147, 1
    %vm167 = vcmp.lt.s32.totalorder %v147, 2
    %vm168 = vcmp.lt.s32.totalorder %v147, 3
    %vm169 = vcmp.lt.s32.totalorder %v147, 4
    %v170 = vsel %vm166, %v150, %v153
    %v171 = vsel %vm169, %v159, 2102212464
    %v172 = vsel %vm168, %v156, %v171
    %v173 = vsel %vm167, %v170, %v172
    %v174 = vsel %vm166, %v153, %v156
    %v175 = vsel %vm169, %v162, 920167782
    %v176 = vsel %vm168, %v159, %v175
    %v177 = vsel %vm167, %v174, %v176
    %v178 = vsel %vm166, %v156, %v159
    %v179 = vsel %vm169, %v165, 1326507024
    %v180 = vsel %vm168, %v162, %v179
    %v181 = vsel %vm167, %v178, %v180
    %v182 = vshll.u32 %v142, 8
    %v183 = vand.u32 %v182, 65535
    %v184 = vshrl.u32 %v182, 16
    %v185 = vand.u32 %v181, 65535
    %v186 = vshrl.u32 %v181, 16
    %v187 = vmul.u32 %v183, %v185
    %v188 = vmul.u32 %v183, %v186
    %v189 = vmul.u32 %v184, %v185
    %v190 = vmul.u32 %v184, %v186
    %v191 = vshll.u32 %v188, 16
    %v192 = vshrl.u32 %v188, 16
    %v193 = vshll.u32 %v189, 16
    %v194 = vshrl.u32 %v189, 16
    %vm195 = vc.u32 %v187, %v191
    %v196 = vsel %vm195, 1, 0
    %v197 = vadd.s32 %v187, %v191
    %v198 = vadd.s32 %v190, %v196
    %vm199 = vc.u32 %v197, %v193
    %v200 = vsel %vm199, 1, 0
    %v201 = vadd.s32 %v197, %v193
    %v202 = vadd.s32 %v198, %v200
    %v203 = vadd.s32 %v202, %v192
    %v204 = vadd.s32 %v203, %v194
    %v205 = vand.u32 %v182, 65535
    %v206 = vshrl.u32 %v182, 16
    %v207 = vand.u32 %v177, 65535
    %v208 = vshrl.u32 %v177, 16
    %v209 = vmul.u32 %v205, %v207
    %v210 = vmul.u32 %v205, %v208
    %v211 = vmul.u32 %v206, %v207
    %v212 = vmul.u32 %v206, %v208
    %v213 = vshll.u32 %v210, 16
    %v214 = vshrl.u32 %v210, 16
    %v215 = vshll.u32 %v211, 16
    %v216 = vshrl.u32 %v211, 16
    %vm217 = vc.u32 %v209, %v213
    %v218 = vsel %vm217, 1, 0
    %v219 = vadd.s32 %v209, %v213
    %v220 = vadd.s32 %v212, %v218
    %vm221 = vc.u32 %v219, %v215
    %v222 = vsel %vm221, 1, 0
    %v223 = vadd.s32 %v219, %v215
    %v224 = vadd.s32 %v220, %v222
    %v225 = vadd.s32 %v224, %v214
    %v226 = vadd.s32 %v225, %v216
    %v227 = vmul.u32 %v182, %v173
    %v228 = vadd.s32 %v204, %v223
    %vm229 = vc.u32 %v204, %v223
    %v230 = vadd.s32 %v226, 1
    %v231 = vsel %vm229, %v230, %v226
    %v232 = vadd.s32 %v227, %v231
    %v233 = vadd.s32 %v232, 536870912
    %v234 = vshrl.u32 %v233, 30
    %v235 = vshll.u32 %v234, 30
    %v236 = vsub.s32 %v232, %v235
    %vm237 = vcmp.lt.s32.totalorder %v236, 0
    %v238 = vsub.s32 0, %v236
    %v239 = vsel %vm237, %v238, %v236
    %v240 = vclz %v239
    %v241 = vsub.s32 %v240, 2
    %vm242 = vcmp.gt.s32.totalorder 0, %v241
    %v243 = vsel %vm242, 0, %v241
    %v244 = vsub.s32 32, %v243
    %v245 = vshll.u32 %v236, %v243
    %v246 = vshrl.u32 %v228, %v244
    %v247 = vor.u32 %v245, %v246
    %v248 = vsub.s32 4294967266, %v243
    %v249 = vadd.s32 %v248, 127
    %v250 = vshll.u32 %v249, 23
    %v251 = vor.u32 4788187, %v250
    %v252 = vand.u32 2147483647, %v251
    %v254 = vcvt.s32.f32 %v247
    %v255 = vmul.f32 %v254, %v252
    %v256 = vxor.u32 %v255, 2147483648
    %v257 = vsel %vm136, %v256, %v255
    %v258 = vsub.s32 4, %v234
    %v259 = vsel %vm136, %v258, %v234
    %v260 = vsel %vm135, %v129, %v257
    %v261 = vsel %vm135, 0, %v259
    %v262 = vmul.f32 %v260, %v260
    %v263 = vmul.f32 %v262, -0.001358992
    %v264 = vadd.f32 %v263, 0.041655596
    %v265 = vmul.f32 %v262, %v264
    %v266 = vadd.f32 %v265, -0.4999988
    %v267 = vmul.f32 %v262, %v266
    %v268 = vadd.f32 1.0, %v267
    %v269 = vmul.f32 %v260, %v260
    %v270 = vmul.f32 %v269, -0.00019511016
    %v271 = vadd.f32 %v270, 0.008332121
    %v272 = vmul.f32 %v269, %v271
    %v273 = vadd.f32 %v272, -0.16666654
    %v274 = vmul.f32 %v269, %v273
    %v275 = vadd.f32 %v274, 1.0
    %v276 = vmul.f32 %v275, %v260
    %vm277 = vweird.f32 %v129
    %v278 = vand.u32 %v261, 3
    %vm279 = vcmp.lt.s32.totalorder %v278, 2
    %vm280 = vcmp.eq.s32.totalorder %v278, 0
    %v281 = vxor.u32 %v276, 2147483648
    %v282 = vsel %vm280, %v268, %v281
    %vm283 = vcmp.eq.s32.totalorder %v278, 2
    %v284 = vxor.u32 %v268, 2147483648
    %v285 = vsel %vm283, %v284, %v276
    %v286 = vsel %vm279, %v282, %v285
    %v287 = vsel %vm277, nan, %v286
    %v288 = vand.u32 2147483647, %v132
    %vm289 = vcmp.le.f32.partialorder %v288, 0.7853982
    %vm290 = vcmp.lt.s32.totalorder %v132, 0
    %v291 = vand.u32 %v132, 2139095040
    %v292 = vshrl.u32 %v291, 23
    %v293 = vsub.s32 %v292, 127
    %v294 = vand.u32 2147483647, %v132
    %v295 = vand.u32 %v294, 8388607
    %v296 = vor.u32 %v295, 8388608
    %v297 = vsub.s32 0, %v296
    %v298 = vadd.s32 %v293, 1
    %vm299 = vcmp.gt.s32.totalorder %v298, 0
    %v300 = vsel %vm299, %v298, 0
    %v301 = vshrl.u32 %v300, 5
    %v302 = vand.u32 %v300, 31
    %v303 = vsub.s32 32, %v302
    %v304 = vshrl.u32 683565275, %v303
    %v305 = vshll.u32 683565275, %v302
    %v306 = vshrl.u32 2475754826, %v303
    %v307 = vor.u32 %v305, %v306
    %v308 = vshll.u32 2475754826, %v302
    %v309 = vshrl.u32 2131351028, %v303
    %v310 = vor.u32 %v308, %v309
    %v311 = vshll.u32 2131351028, %v302
    %v312 = vshrl.u32 2102212464, %v303
    %v313 = vor.u32 %v311, %v312
    %v314 = vshll.u32 2102212464, %v302
    %v315 = vshrl.u32 920167782, %v303
    %v316 = vor.u32 %v314, %v315
    %v317 = vshll.u32 920167782, %v302
    %v318 = vshrl.u32 1326507024, %v303
    %v319 = vor.u32 %v317, %v318
    %vm320 = vcmp.lt.s32.totalorder %v301, 1
    %vm321 = vcmp.lt.s32.totalorder %v301, 2
    %vm322 = vcmp.lt.s32.totalorder %v301, 3
    %vm323 = vcmp.lt.s32.totalorder %v301, 4
    %v324 = vsel %vm320, %v304, %v307
    %v325 = vsel %vm323, %v313, 2102212464
    %v326 = vsel %vm322, %v310, %v325
    %v327 = vsel %vm321, %v324, %v326
    %v328 = vsel %vm320, %v307, %v310
    %v329 = vsel %vm323, %v316, 920167782
    %v330 = vsel %vm322, %v313, %v329
    %v331 = vsel %vm321, %v328, %v330
    %v332 = vsel %vm320, %v310, %v313
    %v333 = vsel %vm323, %v319, 1326507024
    %v334 = vsel %vm322, %v316, %v333
    %v335 = vsel %vm321, %v332, %v334
    %v336 = vshll.u32 %v296, 8
    %v337 = vand.u32 %v336, 65535
    %v338 = vshrl.u32 %v336, 16
    %v339 = vand.u32 %v335, 65535
    %v340 = vshrl.u32 %v335, 16
    %v341 = vmul.u32 %v337, %v339
    %v342 = vmul.u32 %v337, %v340
    %v343 = vmul.u32 %v338, %v339
    %v344 = vmul.u32 %v338, %v340
    %v345 = vshll.u32 %v342, 16
    %v346 = vshrl.u32 %v342, 16
    %v347 = vshll.u32 %v343, 16
    %v348 = vshrl.u32 %v343, 16
    %vm349 = vc.u32 %v341, %v345
    %v350 = vsel %vm349, 1, 0
    %v351 = vadd.s32 %v341, %v345
    %v352 = vadd.s32 %v344, %v350
    %vm353 = vc.u32 %v351, %v347
    %v354 = vsel %vm353, 1, 0
    %v355 = vadd.s32 %v351, %v347
    %v356 = vadd.s32 %v352, %v354
    %v357 = vadd.s32 %v356, %v346
    %v358 = vadd.s32 %v357, %v348
    %v359 = vand.u32 %v336, 65535
    %v360 = vshrl.u32 %v336, 16
    %v361 = vand.u32 %v331, 65535
    %v362 = vshrl.u32 %v331, 16
    %v363 = vmul.u32 %v359, %v361
    %v364 = vmul.u32 %v359, %v362
    %v365 = vmul.u32 %v360, %v361
    %v366 = vmul.u32 %v360, %v362
    %v367 = vshll.u32 %v364, 16
    %v368 = vshrl.u32 %v364, 16
    %v369 = vshll.u32 %v365, 16
    %v370 = vshrl.u32 %v365, 16
    %vm371 = vc.u32 %v363, %v367
    %v372 = vsel %vm371, 1, 0
    %v373 = vadd.s32 %v363, %v367
    %v374 = vadd.s32 %v366, %v372
    %vm375 = vc.u32 %v373, %v369
    %v376 = vsel %vm375, 1, 0
    %v377 = vadd.s32 %v373, %v369
    %v378 = vadd.s32 %v374, %v376
    %v379 = vadd.s32 %v378, %v368
    %v380 = vadd.s32 %v379, %v370
    %v381 = vmul.u32 %v336, %v327
    %v382 = vadd.s32 %v358, %v377
    %vm383 = vc.u32 %v358, %v377
    %v384 = vadd.s32 %v380, 1
    %v385 = vsel %vm383, %v384, %v380
    %v386 = vadd.s32 %v381, %v385
    %v387 = vadd.s32 %v386, 536870912
    %v388 = vshrl.u32 %v387, 30
    %v389 = vshll.u32 %v388, 30
    %v390 = vsub.s32 %v386, %v389
    %vm391 = vcmp.lt.s32.totalorder %v390, 0
    %v392 = vsub.s32 0, %v390
    %v393 = vsel %vm391, %v392, %v390
    %v394 = vclz %v393
    %v395 = vsub.s32 %v394, 2
    %vm396 = vcmp.gt.s32.totalorder 0, %v395
    %v397 = vsel %vm396, 0, %v395
    %v398 = vsub.s32 32, %v397
    %v399 = vshll.u32 %v390, %v397
    %v400 = vshrl.u32 %v382, %v398
    %v401 = vor.u32 %v399, %v400
    %v402 = vsub.s32 4294967266, %v397
    %v403 = vadd.s32 %v402, 127
    %v404 = vshll.u32 %v403, 23
    %v405 = vor.u32 4788187, %v404
    %v406 = vand.u32 2147483647, %v405
    %v408 = vcvt.s32.f32 %v401
    %v409 = vmul.f32 %v408, %v406
    %v410 = vxor.u32 %v409, 2147483648
    %v411 = vsel %vm290, %v410, %v409
    %v412 = vsub.s32 4, %v388
    %v413 = vsel %vm290, %v412, %v388
    %v414 = vsel %vm289, %v132, %v411
    %v415 = vsel %vm289, 0, %v413
    %v416 = vmul.f32 %v414, %v414
    %v417 = vmul.f32 %v416, -0.001358992
    %v418 = vadd.f32 %v417, 0.041655596
    %v419 = vmul.f32 %v416, %v418
    %v420 = vadd.f32 %v419, -0.4999988
    %v421 = vmul.f32 %v416, %v420
    %v422 = vadd.f32 1.0, %v421
    %v423 = vmul.f32 %v414, %v414
    %v424 = vmul.f32 %v423, -0.00019511016
    %v425 = vadd.f32 %v424, 0.008332121
    %v426 = vmul.f32 %v423, %v425
    %v427 = vadd.f32 %v426, -0.16666654
    %v428 = vmul.f32 %v423, %v427
    %v429 = vadd.f32 %v428, 1.0
    %v430 = vmul.f32 %v429, %v414
    %vm431 = vweird.f32 %v132
    %v432 = vand.u32 %v415, 3
    %vm433 = vcmp.lt.s32.totalorder %v432, 2
    %vm434 = vcmp.eq.s32.totalorder %v432, 0
    %v435 = vxor.u32 %v430, 2147483648
    %v436 = vsel %vm434, %v422, %v435
    %vm437 = vcmp.eq.s32.totalorder %v432, 2
    %v438 = vxor.u32 %v422, 2147483648
    %v439 = vsel %vm437, %v438, %v430
    %v440 = vsel %vm433, %v436, %v439
    %v441 = vsel %vm431, nan, %v440
    %v442 = vand.u32 2147483647, %v129
    %vm443 = vcmp.le.f32.partialorder %v442, 0.7853982
    %vm444 = vcmp.lt.s32.totalorder %v129, 0
    %v445 = vand.u32 %v129, 2139095040
    %v446 = vshrl.u32 %v445, 23
    %v447 = vsub.s32 %v446, 127
    %v448 = vand.u32 2147483647, %v129
    %v449 = vand.u32 %v448, 8388607
    %v450 = vor.u32 %v449, 8388608
    %v451 = vsub.s32 0, %v450
    %v452 = vadd.s32 %v447, 1
    %vm453 = vcmp.gt.s32.totalorder %v452, 0
    %v454 = vsel %vm453, %v452, 0
    %v455 = vshrl.u32 %v454, 5
    %v456 = vand.u32 %v454, 31
    %v457 = vsub.s32 32, %v456
    %v458 = vshrl.u32 683565275, %v457
    %v459 = vshll.u32 683565275, %v456
    %v460 = vshrl.u32 2475754826, %v457
    %v461 = vor.u32 %v459, %v460
    %v462 = vshll.u32 2475754826, %v456
    %v463 = vshrl.u32 2131351028, %v457
    %v464 = vor.u32 %v462, %v463
    %v465 = vshll.u32 2131351028, %v456
    %v466 = vshrl.u32 2102212464, %v457
    %v467 = vor.u32 %v465, %v466
    %v468 = vshll.u32 2102212464, %v456
    %v469 = vshrl.u32 920167782, %v457
    %v470 = vor.u32 %v468, %v469
    %v471 = vshll.u32 920167782, %v456
    %v472 = vshrl.u32 1326507024, %v457
    %v473 = vor.u32 %v471, %v472
    %vm474 = vcmp.lt.s32.totalorder %v455, 1
    %vm475 = vcmp.lt.s32.totalorder %v455, 2
    %vm476 = vcmp.lt.s32.totalorder %v455, 3
    %vm477 = vcmp.lt.s32.totalorder %v455, 4
    %v478 = vsel %vm474, %v458, %v461
    %v479 = vsel %vm477, %v467, 2102212464
    %v480 = vsel %vm476, %v464, %v479
    %v481 = vsel %vm475, %v478, %v480
    %v482 = vsel %vm474, %v461, %v464
    %v483 = vsel %vm477, %v470, 920167782
    %v484 = vsel %vm476, %v467, %v483
    %v485 = vsel %vm475, %v482, %v484
    %v486 = vsel %vm474, %v464, %v467
    %v487 = vsel %vm477, %v473, 1326507024
    %v488 = vsel %vm476, %v470, %v487
    %v489 = vsel %vm475, %v486, %v488
    %v490 = vshll.u32 %v450, 8
    %v491 = vand.u32 %v490, 65535
    %v492 = vshrl.u32 %v490, 16
    %v493 = vand.u32 %v489, 65535
    %v494 = vshrl.u32 %v489, 16
    %v495 = vmul.u32 %v491, %v493
    %v496 = vmul.u32 %v491, %v494
    %v497 = vmul.u32 %v492, %v493
    %v498 = vmul.u32 %v492, %v494
    %v499 = vshll.u32 %v496, 16
    %v500 = vshrl.u32 %v496, 16
    %v501 = vshll.u32 %v497, 16
    %v502 = vshrl.u32 %v497, 16
    %vm503 = vc.u32 %v495, %v499
    %v504 = vsel %vm503, 1, 0
    %v505 = vadd.s32 %v495, %v499
    %v506 = vadd.s32 %v498, %v504
    %vm507 = vc.u32 %v505, %v501
    %v508 = vsel %vm507, 1, 0
    %v509 = vadd.s32 %v505, %v501
    %v510 = vadd.s32 %v506, %v508
    %v511 = vadd.s32 %v510, %v500
    %v512 = vadd.s32 %v511, %v502
    %v513 = vand.u32 %v490, 65535
    %v514 = vshrl.u32 %v490, 16
    %v515 = vand.u32 %v485, 65535
    %v516 = vshrl.u32 %v485, 16
    %v517 = vmul.u32 %v513, %v515
    %v518 = vmul.u32 %v513, %v516
    %v519 = vmul.u32 %v514, %v515
    %v520 = vmul.u32 %v514, %v516
    %v521 = vshll.u32 %v518, 16
    %v522 = vshrl.u32 %v518, 16
    %v523 = vshll.u32 %v519, 16
    %v524 = vshrl.u32 %v519, 16
    %vm525 = vc.u32 %v517, %v521
    %v526 = vsel %vm525, 1, 0
    %v527 = vadd.s32 %v517, %v521
    %v528 = vadd.s32 %v520, %v526
    %vm529 = vc.u32 %v527, %v523
    %v530 = vsel %vm529, 1, 0
    %v531 = vadd.s32 %v527, %v523
    %v532 = vadd.s32 %v528, %v530
    %v533 = vadd.s32 %v532, %v522
    %v534 = vadd.s32 %v533, %v524
    %v535 = vmul.u32 %v490, %v481
    %v536 = vadd.s32 %v512, %v531
    %vm537 = vc.u32 %v512, %v531
    %v538 = vadd.s32 %v534, 1
    %v539 = vsel %vm537, %v538, %v534
    %v540 = vadd.s32 %v535, %v539
    %v541 = vadd.s32 %v540, 536870912
    %v542 = vshrl.u32 %v541, 30
    %v543 = vshll.u32 %v542, 30
    %v544 = vsub.s32 %v540, %v543
    %vm545 = vcmp.lt.s32.totalorder %v544, 0
    %v546 = vsub.s32 0, %v544
    %v547 = vsel %vm545, %v546, %v544
    %v548 = vclz %v547
    %v549 = vsub.s32 %v548, 2
    %vm550 = vcmp.gt.s32.totalorder 0, %v549
    %v551 = vsel %vm550, 0, %v549
    %v552 = vsub.s32 32, %v551
    %v553 = vshll.u32 %v544, %v551
    %v554 = vshrl.u32 %v536, %v552
    %v555 = vor.u32 %v553, %v554
    %v556 = vsub.s32 4294967266, %v551
    %v557 = vadd.s32 %v556, 127
    %v558 = vshll.u32 %v557, 23
    %v559 = vor.u32 4788187, %v558
    %v560 = vand.u32 2147483647, %v559
    %v562 = vcvt.s32.f32 %v555
    %v563 = vmul.f32 %v562, %v560
    %v564 = vxor.u32 %v563, 2147483648
    %v565 = vsel %vm444, %v564, %v563
    %v566 = vsub.s32 4, %v542
    %v567 = vsel %vm444, %v566, %v542
    %v568 = vsel %vm443, %v129, %v565
    %v569 = vsel %vm443, 0, %v567
    %v570 = vmul.f32 %v568, %v568
    %v571 = vmul.f32 %v570, -0.001358992
    %v572 = vadd.f32 %v571, 0.041655596
    %v573 = vmul.f32 %v570, %v572
    %v574 = vadd.f32 %v573, -0.4999988
    %v575 = vmul.f32 %v570, %v574
    %v576 = vadd.f32 1.0, %v575
    %v577 = vmul.f32 %v568, %v568
    %v578 = vmul.f32 %v577, -0.00019511016
    %v579 = vadd.f32 %v578, 0.008332121
    %v580 = vmul.f32 %v577, %v579
    %v581 = vadd.f32 %v580, -0.16666654
    %v582 = vmul.f32 %v577, %v581
    %v583 = vadd.f32 %v582, 1.0
    %v584 = vmul.f32 %v583, %v568
    %vm585 = vweird.f32 %v129
    %v586 = vadd.s32 %v569, 3
    %v587 = vand.u32 %v586, 3
    %vm588 = vcmp.lt.s32.totalorder %v587, 2
    %vm589 = vcmp.eq.s32.totalorder %v587, 0
    %v590 = vxor.u32 %v584, 2147483648
    %v591 = vsel %vm589, %v576, %v590
    %vm592 = vcmp.eq.s32.totalorder %v587, 2
    %v593 = vxor.u32 %v576, 2147483648
    %v594 = vsel %vm592, %v593, %v584
    %v595 = vsel %vm588, %v591, %v594
    %v596 = vsel %vm585, nan, %v595
    %v597 = vand.u32 2147483647, %v132
    %vm598 = vcmp.le.f32.partialorder %v597, 0.7853982
    %vm599 = vcmp.lt.s32.totalorder %v132, 0
    %v600 = vand.u32 %v132, 2139095040
    %v601 = vshrl.u32 %v600, 23
    %v602 = vsub.s32 %v601, 127
    %v603 = vand.u32 2147483647, %v132
    %v604 = vand.u32 %v603, 8388607
    %v605 = vor.u32 %v604, 8388608
    %v606 = vsub.s32 0, %v605
    %v607 = vadd.s32 %v602, 1
    %vm608 = vcmp.gt.s32.totalorder %v607, 0
    %v609 = vsel %vm608, %v607, 0
    %v610 = vshrl.u32 %v609, 5
    %v611 = vand.u32 %v609, 31
    %v612 = vsub.s32 32, %v611
    %v613 = vshrl.u32 683565275, %v612
    %v614 = vshll.u32 683565275, %v611
    %v615 = vshrl.u32 2475754826, %v612
    %v616 = vor.u32 %v614, %v615
    %v617 = vshll.u32 2475754826, %v611
    %v618 = vshrl.u32 2131351028, %v612
    %v619 = vor.u32 %v617, %v618
    %v620 = vshll.u32 2131351028, %v611
    %v621 = vshrl.u32 2102212464, %v612
    %v622 = vor.u32 %v620, %v621
    %v623 = vshll.u32 2102212464, %v611
    %v624 = vshrl.u32 920167782, %v612
    %v625 = vor.u32 %v623, %v624
    %v626 = vshll.u32 920167782, %v611
    %v627 = vshrl.u32 1326507024, %v612
    %v628 = vor.u32 %v626, %v627
    %vm629 = vcmp.lt.s32.totalorder %v610, 1
    %vm630 = vcmp.lt.s32.totalorder %v610, 2
    %vm631 = vcmp.lt.s32.totalorder %v610, 3
    %vm632 = vcmp.lt.s32.totalorder %v610, 4
    %v633 = vsel %vm629, %v613, %v616
    %v634 = vsel %vm632, %v622, 2102212464
    %v635 = vsel %vm631, %v619, %v634
    %v636 = vsel %vm630, %v633, %v635
    %v637 = vsel %vm629, %v616, %v619
    %v638 = vsel %vm632, %v625, 920167782
    %v639 = vsel %vm631, %v622, %v638
    %v640 = vsel %vm630, %v637, %v639
    %v641 = vsel %vm629, %v619, %v622
    %v642 = vsel %vm632, %v628, 1326507024
    %v643 = vsel %vm631, %v625, %v642
    %v644 = vsel %vm630, %v641, %v643
    %v645 = vshll.u32 %v605, 8
    %v646 = vand.u32 %v645, 65535
    %v647 = vshrl.u32 %v645, 16
    %v648 = vand.u32 %v644, 65535
    %v649 = vshrl.u32 %v644, 16
    %v650 = vmul.u32 %v646, %v648
    %v651 = vmul.u32 %v646, %v649
    %v652 = vmul.u32 %v647, %v648
    %v653 = vmul.u32 %v647, %v649
    %v654 = vshll.u32 %v651, 16
    %v655 = vshrl.u32 %v651, 16
    %v656 = vshll.u32 %v652, 16
    %v657 = vshrl.u32 %v652, 16
    %vm658 = vc.u32 %v650, %v654
    %v659 = vsel %vm658, 1, 0
    %v660 = vadd.s32 %v650, %v654
    %v661 = vadd.s32 %v653, %v659
    %vm662 = vc.u32 %v660, %v656
    %v663 = vsel %vm662, 1, 0
    %v664 = vadd.s32 %v660, %v656
    %v665 = vadd.s32 %v661, %v663
    %v666 = vadd.s32 %v665, %v655
    %v667 = vadd.s32 %v666, %v657
    %v668 = vand.u32 %v645, 65535
    %v669 = vshrl.u32 %v645, 16
    %v670 = vand.u32 %v640, 65535
    %v671 = vshrl.u32 %v640, 16
    %v672 = vmul.u32 %v668, %v670
    %v673 = vmul.u32 %v668, %v671
    %v674 = vmul.u32 %v669, %v670
    %v675 = vmul.u32 %v669, %v671
    %v676 = vshll.u32 %v673, 16
    %v677 = vshrl.u32 %v673, 16
    %v678 = vshll.u32 %v674, 16
    %v679 = vshrl.u32 %v674, 16
    %vm680 = vc.u32 %v672, %v676
    %v681 = vsel %vm680, 1, 0
    %v682 = vadd.s32 %v672, %v676
    %v683 = vadd.s32 %v675, %v681
    %vm684 = vc.u32 %v682, %v678
    %v685 = vsel %vm684, 1, 0
    %v686 = vadd.s32 %v682, %v678
    %v687 = vadd.s32 %v683, %v685
    %v688 = vadd.s32 %v687, %v677
    %v689 = vadd.s32 %v688, %v679
    %v690 = vmul.u32 %v645, %v636
    %v691 = vadd.s32 %v667, %v686
    %vm692 = vc.u32 %v667, %v686
    %v693 = vadd.s32 %v689, 1
    %v694 = vsel %vm692, %v693, %v689
    %v695 = vadd.s32 %v690, %v694
    %v696 = vadd.s32 %v695, 536870912
    %v697 = vshrl.u32 %v696, 30
    %v698 = vshll.u32 %v697, 30
    %v699 = vsub.s32 %v695, %v698
    %vm700 = vcmp.lt.s32.totalorder %v699, 0
    %v701 = vsub.s32 0, %v699
    %v702 = vsel %vm700, %v701, %v699
    %v703 = vclz %v702
    %v704 = vsub.s32 %v703, 2
    %vm705 = vcmp.gt.s32.totalorder 0, %v704
    %v706 = vsel %vm705, 0, %v704
    %v707 = vsub.s32 32, %v706
    %v708 = vshll.u32 %v699, %v706
    %v709 = vshrl.u32 %v691, %v707
    %v710 = vor.u32 %v708, %v709
    %v711 = vsub.s32 4294967266, %v706
    %v712 = vadd.s32 %v711, 127
    %v713 = vshll.u32 %v712, 23
    %v714 = vor.u32 4788187, %v713
    %v715 = vand.u32 2147483647, %v714
    %v717 = vcvt.s32.f32 %v710
    %v718 = vmul.f32 %v717, %v715
    %v719 = vxor.u32 %v718, 2147483648
    %v720 = vsel %vm599, %v719, %v718
    %v721 = vsub.s32 4, %v697
    %v722 = vsel %vm599, %v721, %v697
    %v723 = vsel %vm598, %v132, %v720
    %v724 = vsel %vm598, 0, %v722
    %v725 = vmul.f32 %v723, %v723
    %v726 = vmul.f32 %v725, -0.001358992
    %v727 = vadd.f32 %v726, 0.041655596
    %v728 = vmul.f32 %v725, %v727
    %v729 = vadd.f32 %v728, -0.4999988
    %v730 = vmul.f32 %v725, %v729
    %v731 = vadd.f32 1.0, %v730
    %v732 = vmul.f32 %v723, %v723
    %v733 = vmul.f32 %v732, -0.00019511016
    %v734 = vadd.f32 %v733, 0.008332121
    %v735 = vmul.f32 %v732, %v734
    %v736 = vadd.f32 %v735, -0.16666654
    %v737 = vmul.f32 %v732, %v736
    %v738 = vadd.f32 %v737, 1.0
    %v739 = vmul.f32 %v738, %v723
    %vm740 = vweird.f32 %v132
    %v741 = vadd.s32 %v724, 3
    %v742 = vand.u32 %v741, 3
    %vm743 = vcmp.lt.s32.totalorder %v742, 2
    %vm744 = vcmp.eq.s32.totalorder %v742, 0
    %v745 = vxor.u32 %v739, 2147483648
    %v746 = vsel %vm744, %v731, %v745
    %vm747 = vcmp.eq.s32.totalorder %v742, 2
    %v748 = vxor.u32 %v731, 2147483648
    %v749 = vsel %vm747, %v748, %v739
    %v750 = vsel %vm743, %v746, %v749
    %v751 = vsel %vm740, nan, %v750
    %v752 = vmul.f32 %v80, %v287
    %v753 = vmul.f32 %v82, %v441
    %756 = vrot.lane.b32.xlu0 %v596, 32
    %v757 = vpop.permute.xlu0 %756
    %758 = vrot.lane.b32.xlu0 %v751, 32
    %v759 = vpop.permute.xlu0 %758
    %v762 = vmul.f32 %v80, %v757
    %v763 = vmul.f32 %v82, %v759
    %766 = vrot.lane.b32.xlu0 %v762, 96
    %v767 = vpop.permute.xlu0 %766
    %768 = vrot.lane.b32.xlu0 %v763, 96
    %v769 = vpop.permute.xlu0 %768
    %v772 = vadd.f32 %v752, %v767
    %v773 = vadd.f32 %v753, %v769
    %776 = vrot.lane.b32.xlu0 %v287, 64
    %v777 = vpop.permute.xlu0 %776
    %778 = vrot.lane.b32.xlu0 %v441, 64
    %v779 = vpop.permute.xlu0 %778
    %v782 = vmul.f32 %v80, %v777
    %v783 = vmul.f32 %v82, %v779
    %784 = vrot.lane.b32.xlu0 %v596, 96
    %v785 = vpop.permute.xlu0 %784
    %786 = vrot.lane.b32.xlu0 %v751, 96
    %v787 = vpop.permute.xlu0 %786
    %v790 = vmul.f32 %v80, %v785
    %v791 = vmul.f32 %v82, %v787
    %794 = vrot.lane.b32.xlu0 %v790, 96
    %v795 = vpop.permute.xlu0 %794
    %796 = vrot.lane.b32.xlu0 %v791, 96
    %v797 = vpop.permute.xlu0 %796
    %v800 = vadd.f32 %v782, %v795
    %v801 = vadd.f32 %v783, %v797
    %810 = vrot.lane.b32.xlu0 %v42, 80
    %v811 = vpop.permute.xlu0 %810
    %812 = vrot.lane.b32.xlu0 %v43, 80
    %v813 = vpop.permute.xlu0 %812
    %814 = vrot.lane.b32.xlu0 %v44, 80
    %v815 = vpop.permute.xlu0 %814
    %816 = vrot.lane.b32.xlu0 %v45, 80
    %v817 = vpop.permute.xlu0 %816
    %818 = vrot.lane.b32.xlu0 %v46, 80
    %v819 = vpop.permute.xlu0 %818
    %820 = vrot.lane.b32.xlu0 %v47, 80
    %v821 = vpop.permute.xlu0 %820
    %822 = vrot.lane.b32.xlu0 %v48, 80
    %v823 = vpop.permute.xlu0 %822
    %824 = vrot.lane.b32.xlu0 %v49, 80
    %v825 = vpop.permute.xlu0 %824
    %828 = vrot.lane.b32.xlu0 %v772, 120
    %v829 = vpop.permute.xlu0 %828
    %830 = vrot.lane.b32.xlu0 %v773, 120
    %v831 = vpop.permute.xlu0 %830
    %vm834 = vcmask 130048
    %v835 = vsel %vm834, %v811, 0
    %v837 = vsel %vm834, %v813, 0
    %v839 = vsel %vm834, %v815, 0
    %v841 = vsel %vm834, %v817, 0
    %v843 = vsel %vm834, %v819, 0
    %v845 = vsel %vm834, %v821, 0
    %v847 = vsel %vm834, %v823, 0
    %v849 = vsel %vm834, %v825, 0
    %851 = vmatpush.msra.mxu0 0.0
    %852 = vmatpush.msra.mxu0 0.0
    %853 = vmatpush.msra.mxu0 0.0
    %854 = vmatpush.msra.mxu0 0.0
    %855 = vmatpush.msra.mxu0 0.0
    %856 = vmatpush.msra.mxu0 0.0
    %857 = vmatpush.msra.mxu0 0.0
    %858 = vmatpush.msra.mxu0 0.0
    %859 = vmatpush.msra.mxu0 0.0
    %860 = vmatpush.msra.mxu0 0.0
    %861 = vmatpush.msra.mxu0 0.0
    %862 = vmatpush.msra.mxu0 0.0
    %863 = vmatpush.msra.mxu0 0.0
    %864 = vmatpush.msra.mxu0 0.0
    %865 = vmatpush.msra.mxu0 %v831
    %866 = vmatpush.msra.mxu0 %v829
    %867 = vmatmul.f32.gmra.mxu0 %v835
    %v868 = vpop.f32.mrf.mxu0
    %v869 = vadd.f32 0.0, %v868
    %870 = vmatmul.f32.gmra.mxu0 %v837
    %v871 = vpop.f32.mrf.mxu0
    %v872 = vadd.f32 0.0, %v871
    %873 = vmatmul.f32.gmra.mxu0 %v839
    %v874 = vpop.f32.mrf.mxu0
    %v875 = vadd.f32 0.0, %v874
    %876 = vmatmul.f32.gmra.mxu0 %v841
    %v877 = vpop.f32.mrf.mxu0
    %v878 = vadd.f32 0.0, %v877
    %879 = vmatmul.f32.gmra.mxu0 %v843
    %v880 = vpop.f32.mrf.mxu0
    %v881 = vadd.f32 0.0, %v880
    %882 = vmatmul.f32.gmra.mxu0 %v845
    %v883 = vpop.f32.mrf.mxu0
    %v884 = vadd.f32 0.0, %v883
    %885 = vmatmul.f32.gmra.mxu0 %v847
    %v886 = vpop.f32.mrf.mxu0
    %v887 = vadd.f32 0.0, %v886
    %888 = vmatmul.f32.gmra.mxu0 %v849
    %v889 = vpop.f32.mrf.mxu0
    %v890 = vadd.f32 0.0, %v889
    %891 = vdwg.mxu0
    %892 = vrot.lane.b32.xlu0 %v42, 96
    %v893 = vpop.permute.xlu0 %892
    %894 = vrot.lane.b32.xlu0 %v43, 96
    %v895 = vpop.permute.xlu0 %894
    %896 = vrot.lane.b32.xlu0 %v44, 96
    %v897 = vpop.permute.xlu0 %896
    %898 = vrot.lane.b32.xlu0 %v45, 96
    %v899 = vpop.permute.xlu0 %898
    %900 = vrot.lane.b32.xlu0 %v46, 96
    %v901 = vpop.permute.xlu0 %900
    %902 = vrot.lane.b32.xlu0 %v47, 96
    %v903 = vpop.permute.xlu0 %902
    %904 = vrot.lane.b32.xlu0 %v48, 96
    %v905 = vpop.permute.xlu0 %904
    %906 = vrot.lane.b32.xlu0 %v49, 96
    %v907 = vpop.permute.xlu0 %906
    %v908 = vsel %vm834, %v893, 0
    %v910 = vsel %vm834, %v895, 0
    %v912 = vsel %vm834, %v897, 0
    %v914 = vsel %vm834, %v899, 0
    %v916 = vsel %vm834, %v901, 0
    %v918 = vsel %vm834, %v903, 0
    %v920 = vsel %vm834, %v905, 0
    %v922 = vsel %vm834, %v907, 0
    %924 = vmatpush.msra.mxu0 0.0
    %925 = vmatpush.msra.mxu0 0.0
    %926 = vmatpush.msra.mxu0 0.0
    %927 = vmatpush.msra.mxu0 0.0
    %928 = vmatpush.msra.mxu0 0.0
    %929 = vmatpush.msra.mxu0 0.0
    %930 = vmatpush.msra.mxu0 0.0
    %931 = vmatpush.msra.mxu0 0.0
    %932 = vmatpush.msra.mxu0 0.0
    %933 = vmatpush.msra.mxu0 0.0
    %934 = vmatpush.msra.mxu0 0.0
    %935 = vmatpush.msra.mxu0 0.0
    %936 = vmatpush.msra.mxu0 0.0
    %937 = vmatpush.msra.mxu0 0.0
    %938 = vmatpush.msra.mxu0 %v773
    %939 = vmatpush.msra.mxu0 %v772
    %940 = vmatmul.f32.gmra.mxu0 %v908
    %v941 = vpop.f32.mrf.mxu0
    %v942 = vadd.f32 %v869, %v941
    %943 = vmatmul.f32.gmra.mxu0 %v910
    %v944 = vpop.f32.mrf.mxu0
    %v945 = vadd.f32 %v872, %v944
    %946 = vmatmul.f32.gmra.mxu0 %v912
    %v947 = vpop.f32.mrf.mxu0
    %v948 = vadd.f32 %v875, %v947
    %949 = vmatmul.f32.gmra.mxu0 %v914
    %v950 = vpop.f32.mrf.mxu0
    %v951 = vadd.f32 %v878, %v950
    %952 = vmatmul.f32.gmra.mxu0 %v916
    %v953 = vpop.f32.mrf.mxu0
    %v954 = vadd.f32 %v881, %v953
    %955 = vmatmul.f32.gmra.mxu0 %v918
    %v956 = vpop.f32.mrf.mxu0
    %v957 = vadd.f32 %v884, %v956
    %958 = vmatmul.f32.gmra.mxu0 %v920
    %v959 = vpop.f32.mrf.mxu0
    %v960 = vadd.f32 %v887, %v959
    %961 = vmatmul.f32.gmra.mxu0 %v922
    %v962 = vpop.f32.mrf.mxu0
    %v963 = vadd.f32 %v890, %v962
    %964 = vdwg.mxu0
    %965 = vrot.lane.b32.xlu0 %v42, 64
    %v966 = vpop.permute.xlu0 %965
    %967 = vrot.lane.b32.xlu0 %v43, 64
    %v968 = vpop.permute.xlu0 %967
    %969 = vrot.lane.b32.xlu0 %v44, 64
    %v970 = vpop.permute.xlu0 %969
    %971 = vrot.lane.b32.xlu0 %v45, 64
    %v972 = vpop.permute.xlu0 %971
    %973 = vrot.lane.b32.xlu0 %v46, 64
    %v974 = vpop.permute.xlu0 %973
    %975 = vrot.lane.b32.xlu0 %v47, 64
    %v976 = vpop.permute.xlu0 %975
    %977 = vrot.lane.b32.xlu0 %v48, 64
    %v978 = vpop.permute.xlu0 %977
    %979 = vrot.lane.b32.xlu0 %v49, 64
    %v980 = vpop.permute.xlu0 %979
    %981 = vrot.lane.b32.xlu0 %v772, 112
    %v982 = vpop.permute.xlu0 %981
    %983 = vrot.lane.b32.xlu0 %v773, 112
    %v984 = vpop.permute.xlu0 %983
    %v987 = vsel %vm834, %v966, 0
    %v989 = vsel %vm834, %v968, 0
    %v991 = vsel %vm834, %v970, 0
    %v993 = vsel %vm834, %v972, 0
    %v995 = vsel %vm834, %v974, 0
    %v997 = vsel %vm834, %v976, 0
    %v999 = vsel %vm834, %v978, 0
    %v1001 = vsel %vm834, %v980, 0
    %1003 = vmatpush.msra.mxu0 0.0
    %1004 = vmatpush.msra.mxu0 0.0
    %1005 = vmatpush.msra.mxu0 0.0
    %1006 = vmatpush.msra.mxu0 0.0
    %1007 = vmatpush.msra.mxu0 0.0
    %1008 = vmatpush.msra.mxu0 0.0
    %1009 = vmatpush.msra.mxu0 0.0
    %1010 = vmatpush.msra.mxu0 0.0
    %1011 = vmatpush.msra.mxu0 0.0
    %1012 = vmatpush.msra.mxu0 0.0
    %1013 = vmatpush.msra.mxu0 0.0
    %1014 = vmatpush.msra.mxu0 0.0
    %1015 = vmatpush.msra.mxu0 0.0
    %1016 = vmatpush.msra.mxu0 0.0
    %1017 = vmatpush.msra.mxu0 %v984
    %1018 = vmatpush.msra.mxu0 %v982
    %1019 = vmatmul.f32.gmra.mxu0 %v987
    %v1020 = vpop.f32.mrf.mxu0
    %v1021 = vadd.f32 0.0, %v1020
    %1022 = vmatmul.f32.gmra.mxu0 %v989
    %v1023 = vpop.f32.mrf.mxu0
    %v1024 = vadd.f32 0.0, %v1023
    %1025 = vmatmul.f32.gmra.mxu0 %v991
    %v1026 = vpop.f32.mrf.mxu0
    %v1027 = vadd.f32 0.0, %v1026
    %1028 = vmatmul.f32.gmra.mxu0 %v993
    %v1029 = vpop.f32.mrf.mxu0
    %v1030 = vadd.f32 0.0, %v1029
    %1031 = vmatmul.f32.gmra.mxu0 %v995
    %v1032 = vpop.f32.mrf.mxu0
    %v1033 = vadd.f32 0.0, %v1032
    %1034 = vmatmul.f32.gmra.mxu0 %v997
    %v1035 = vpop.f32.mrf.mxu0
    %v1036 = vadd.f32 0.0, %v1035
    %1037 = vmatmul.f32.gmra.mxu0 %v999
    %v1038 = vpop.f32.mrf.mxu0
    %v1039 = vadd.f32 0.0, %v1038
    %1040 = vmatmul.f32.gmra.mxu0 %v1001
    %v1041 = vpop.f32.mrf.mxu0
    %v1042 = vadd.f32 0.0, %v1041
    %1043 = vdwg.mxu0
    %v1044 = vadd.f32 %v942, %v1021
    %v1045 = vadd.f32 %v945, %v1024
    %v1046 = vadd.f32 %v948, %v1027
    %v1047 = vadd.f32 %v951, %v1030
    %v1048 = vadd.f32 %v954, %v1033
    %v1049 = vadd.f32 %v957, %v1036
    %v1050 = vadd.f32 %v960, %v1039
    %v1051 = vadd.f32 %v963, %v1042
    %1052 = vrot.lane.b32.xlu0 %v42, 48
    %v1053 = vpop.permute.xlu0 %1052
    %1054 = vrot.lane.b32.xlu0 %v43, 48
    %v1055 = vpop.permute.xlu0 %1054
    %1056 = vrot.lane.b32.xlu0 %v44, 48
    %v1057 = vpop.permute.xlu0 %1056
    %1058 = vrot.lane.b32.xlu0 %v45, 48
    %v1059 = vpop.permute.xlu0 %1058
    %1060 = vrot.lane.b32.xlu0 %v46, 48
    %v1061 = vpop.permute.xlu0 %1060
    %1062 = vrot.lane.b32.xlu0 %v47, 48
    %v1063 = vpop.permute.xlu0 %1062
    %1064 = vrot.lane.b32.xlu0 %v48, 48
    %v1065 = vpop.permute.xlu0 %1064
    %1066 = vrot.lane.b32.xlu0 %v49, 48
    %v1067 = vpop.permute.xlu0 %1066
    %1068 = vrot.lane.b32.xlu0 %v772, 104
    %v1069 = vpop.permute.xlu0 %1068
    %1070 = vrot.lane.b32.xlu0 %v773, 104
    %v1071 = vpop.permute.xlu0 %1070
    %v1074 = vsel %vm834, %v1053, 0
    %v1076 = vsel %vm834, %v1055, 0
    %v1078 = vsel %vm834, %v1057, 0
    %v1080 = vsel %vm834, %v1059, 0
    %v1082 = vsel %vm834, %v1061, 0
    %v1084 = vsel %vm834, %v1063, 0
    %v1086 = vsel %vm834, %v1065, 0
    %v1088 = vsel %vm834, %v1067, 0
    %1090 = vmatpush.msra.mxu0 0.0
    %1091 = vmatpush.msra.mxu0 0.0
    %1092 = vmatpush.msra.mxu0 0.0
    %1093 = vmatpush.msra.mxu0 0.0
    %1094 = vmatpush.msra.mxu0 0.0
    %1095 = vmatpush.msra.mxu0 0.0
    %1096 = vmatpush.msra.mxu0 0.0
    %1097 = vmatpush.msra.mxu0 0.0
    %1098 = vmatpush.msra.mxu0 0.0
    %1099 = vmatpush.msra.mxu0 0.0
    %1100 = vmatpush.msra.mxu0 0.0
    %1101 = vmatpush.msra.mxu0 0.0
    %1102 = vmatpush.msra.mxu0 0.0
    %1103 = vmatpush.msra.mxu0 0.0
    %1104 = vmatpush.msra.mxu0 %v1071
    %1105 = vmatpush.msra.mxu0 %v1069
    %1106 = vmatmul.f32.gmra.mxu0 %v1074
    %v1107 = vpop.f32.mrf.mxu0
    %v1108 = vadd.f32 0.0, %v1107
    %1109 = vmatmul.f32.gmra.mxu0 %v1076
    %v1110 = vpop.f32.mrf.mxu0
    %v1111 = vadd.f32 0.0, %v1110
    %1112 = vmatmul.f32.gmra.mxu0 %v1078
    %v1113 = vpop.f32.mrf.mxu0
    %v1114 = vadd.f32 0.0, %v1113
    %1115 = vmatmul.f32.gmra.mxu0 %v1080
    %v1116 = vpop.f32.mrf.mxu0
    %v1117 = vadd.f32 0.0, %v1116
    %1118 = vmatmul.f32.gmra.mxu0 %v1082
    %v1119 = vpop.f32.mrf.mxu0
    %v1120 = vadd.f32 0.0, %v1119
    %1121 = vmatmul.f32.gmra.mxu0 %v1084
    %v1122 = vpop.f32.mrf.mxu0
    %v1123 = vadd.f32 0.0, %v1122
    %1124 = vmatmul.f32.gmra.mxu0 %v1086
    %v1125 = vpop.f32.mrf.mxu0
    %v1126 = vadd.f32 0.0, %v1125
    %1127 = vmatmul.f32.gmra.mxu0 %v1088
    %v1128 = vpop.f32.mrf.mxu0
    %v1129 = vadd.f32 0.0, %v1128
    %1130 = vdwg.mxu0
    %v1131 = vadd.f32 %v1044, %v1108
    %v1132 = vadd.f32 %v1045, %v1111
    %v1133 = vadd.f32 %v1046, %v1114
    %v1134 = vadd.f32 %v1047, %v1117
    %v1135 = vadd.f32 %v1048, %v1120
    %v1136 = vadd.f32 %v1049, %v1123
    %v1137 = vadd.f32 %v1050, %v1126
    %v1138 = vadd.f32 %v1051, %v1129
    %1143 = vrot.lane.b32.xlu0 %v35, 16
    %v1144 = vpop.permute.xlu0 %1143
    %1145 = vrot.lane.b32.xlu0 %v37, 16
    %v1146 = vpop.permute.xlu0 %1145
    %1147 = vrot.lane.b32.xlu0 %v39, 16
    %v1148 = vpop.permute.xlu0 %1147
    %1149 = vrot.lane.b32.xlu0 %v41, 16
    %v1150 = vpop.permute.xlu0 %1149
    %1153 = vrot.lane.b32.xlu0 %v800, 48
    %v1154 = vpop.permute.xlu0 %1153
    %1155 = vrot.lane.b32.xlu0 %v801, 48
    %v1156 = vpop.permute.xlu0 %1155
    %v1159 = vsel %vm834, %v1144, 0
    %v1161 = vsel %vm834, %v1146, 0
    %v1163 = vsel %vm834, %v1148, 0
    %v1165 = vsel %vm834, %v1150, 0
    %1167 = vmatpush.msra.mxu0 0.0
    %1168 = vmatpush.msra.mxu0 0.0
    %1169 = vmatpush.msra.mxu0 0.0
    %1170 = vmatpush.msra.mxu0 0.0
    %1171 = vmatpush.msra.mxu0 0.0
    %1172 = vmatpush.msra.mxu0 0.0
    %1173 = vmatpush.msra.mxu0 0.0
    %1174 = vmatpush.msra.mxu0 0.0
    %1175 = vmatpush.msra.mxu0 0.0
    %1176 = vmatpush.msra.mxu0 0.0
    %1177 = vmatpush.msra.mxu0 0.0
    %1178 = vmatpush.msra.mxu0 0.0
    %1179 = vmatpush.msra.mxu0 0.0
    %1180 = vmatpush.msra.mxu0 0.0
    %1181 = vmatpush.msra.mxu0 %v1156
    %1182 = vmatpush.msra.mxu0 %v1154
    %1183 = vmatmul.f32.gmra.mxu0 %v1159
    %v1184 = vpop.f32.mrf.mxu0
    %v1185 = vadd.f32 0.0, %v1184
    %1186 = vmatmul.f32.gmra.mxu0 %v1161
    %v1187 = vpop.f32.mrf.mxu0
    %v1188 = vadd.f32 0.0, %v1187
    %1189 = vmatmul.f32.gmra.mxu0 %v1163
    %v1190 = vpop.f32.mrf.mxu0
    %v1191 = vadd.f32 0.0, %v1190
    %1192 = vmatmul.f32.gmra.mxu0 %v1165
    %v1193 = vpop.f32.mrf.mxu0
    %v1194 = vadd.f32 0.0, %v1193
    %1195 = vdwg.mxu0
    %1196 = vrot.lane.b32.xlu0 %v35, 32
    %v1197 = vpop.permute.xlu0 %1196
    %1198 = vrot.lane.b32.xlu0 %v37, 32
    %v1199 = vpop.permute.xlu0 %1198
    %1200 = vrot.lane.b32.xlu0 %v39, 32
    %v1201 = vpop.permute.xlu0 %1200
    %1202 = vrot.lane.b32.xlu0 %v41, 32
    %v1203 = vpop.permute.xlu0 %1202
    %1204 = vrot.lane.b32.xlu0 %v800, 64
    %v1205 = vpop.permute.xlu0 %1204
    %1206 = vrot.lane.b32.xlu0 %v801, 64
    %v1207 = vpop.permute.xlu0 %1206
    %v1210 = vsel %vm834, %v1197, 0
    %v1212 = vsel %vm834, %v1199, 0
    %v1214 = vsel %vm834, %v1201, 0
    %v1216 = vsel %vm834, %v1203, 0
    %1218 = vmatpush.msra.mxu0 0.0
    %1219 = vmatpush.msra.mxu0 0.0
    %1220 = vmatpush.msra.mxu0 0.0
    %1221 = vmatpush.msra.mxu0 0.0
    %1222 = vmatpush.msra.mxu0 0.0
    %1223 = vmatpush.msra.mxu0 0.0
    %1224 = vmatpush.msra.mxu0 0.0
    %1225 = vmatpush.msra.mxu0 0.0
    %1226 = vmatpush.msra.mxu0 0.0
    %1227 = vmatpush.msra.mxu0 0.0
    %1228 = vmatpush.msra.mxu0 0.0
    %1229 = vmatpush.msra.mxu0 0.0
    %1230 = vmatpush.msra.mxu0 0.0
    %1231 = vmatpush.msra.mxu0 0.0
    %1232 = vmatpush.msra.mxu0 %v1207
    %1233 = vmatpush.msra.mxu0 %v1205
    %1234 = vmatmul.f32.gmra.mxu0 %v1210
    %v1235 = vpop.f32.mrf.mxu0
    %v1236 = vadd.f32 %v1185, %v1235
    %1237 = vmatmul.f32.gmra.mxu0 %v1212
    %v1238 = vpop.f32.mrf.mxu0
    %v1239 = vadd.f32 %v1188, %v1238
    %1240 = vmatmul.f32.gmra.mxu0 %v1214
    %v1241 = vpop.f32.mrf.mxu0
    %v1242 = vadd.f32 %v1191, %v1241
    %1243 = vmatmul.f32.gmra.mxu0 %v1216
    %v1244 = vpop.f32.mrf.mxu0
    %v1245 = vadd.f32 %v1194, %v1244
    %1246 = vdwg.mxu0
    %vm1247 = vcmask 64512
    %v1249 = vsel %vm1247, %v1131, 0
    %v1252 = vsel %vm1247, %v1132, 0
    %1254 = vmatpush.msra.mxu0 0.0
    %1255 = vmatpush.msra.mxu0 0.0
    %1256 = vmatpush.msra.mxu0 0.0
    %1257 = vmatpush.msra.mxu0 0.0
    %1258 = vmatpush.msra.mxu0 0.0
    %1259 = vmatpush.msra.mxu0 0.0
    %1260 = vmatpush.msra.mxu0 0.0
    %1261 = vmatpush.msra.mxu0 0.0
    %1262 = vmatpush.msra.mxu0 0.0
    %1263 = vmatpush.msra.mxu0 0.0
    %1264 = vmatpush.msra.mxu0 0.0
    %1265 = vmatpush.msra.mxu0 0.0
    %1266 = vmatpush.msra.mxu0 0.0
    %1267 = vmatpush.msra.mxu0 0.0
    %1268 = vmatpush.msra.mxu0 0.0
    %1269 = vmatpush.msra.mxu0 %v1236
    %1270 = vmatmul.f32.gmra.mxu0 %v1249
    %v1271 = vpop.f32.mrf.mxu0
    %v1272 = vadd.f32 0.0, %v1271
    %1273 = vmatmul.f32.gmra.mxu0 %v1252
    %v1274 = vpop.f32.mrf.mxu0
    %v1275 = vadd.f32 0.0, %v1274
    %1276 = vdwg.mxu0
    %v1277 = vmul.f32 %v1272, 0.35355338
    %v1278 = vmul.f32 %v1275, 0.35355338
    %v1279 = vmax.f32 %v1277, -5.0
    %v1280 = vmax.f32 %v1278, -5.0
    %v1281 = vmin.f32 %v1279, 5.0
    %v1282 = vmin.f32 %v1280, 5.0
    %v1283 = vmul.f32 %v1281, 1.442695
    %v1284 = vpow.pop %v1283
    %v1285 = vmul.f32 %v1282, 1.442695
    %v1286 = vpow.pop %v1285
    %v1287 = vsel %vm834, %v1284, 0.0
    %1288 = vadd.xlane.f32.xlu0 %v1287
    %v1289 = vpop.xlane.xlu0 %1288
    %v1290 = vsel %vm834, %v1286, 0.0
    %1291 = vadd.xlane.f32.xlu0 %v1290
    %v1292 = vpop.xlane.xlu0 %1291
    %v1293 = vrcp.pop %v1289
    %v1294 = vmul.f32 %v1289, %v1293
    %v1295 = vsub.f32 1.0, %v1294
    %v1296 = vmul.f32 %v1293, %v1295
    %v1297 = vadd.f32 %v1293, %v1296
    %vm1298 = vweird.f32 %v1289
    %vm1299 = vweird.f32 %v1293
    %vm1300 = vmor %vm1298, %vm1299
    %v1301 = vsel %vm1300, %v1293, %v1297
    %v1302 = vand.u32 2147483647, %v1289
    %vm1303 = vcmp.eq.f32.partialorder %v1302, 8.507059e+37
    %v1304 = vand.u32 %v1289, 2147483648
    %v1305 = vor.u32 1.1754944e-38, %v1304
    %v1306 = vsel %vm1303, %v1305, %v1301
    %v1307 = vmul.f32 %v1284, %v1306
    %v1308 = vrcp.pop %v1292
    %v1309 = vmul.f32 %v1292, %v1308
    %v1310 = vsub.f32 1.0, %v1309
    %v1311 = vmul.f32 %v1308, %v1310
    %v1312 = vadd.f32 %v1308, %v1311
    %vm1313 = vweird.f32 %v1292
    %vm1314 = vweird.f32 %v1308
    %vm1315 = vmor %vm1313, %vm1314
    %v1316 = vsel %vm1315, %v1308, %v1312
    %v1317 = vand.u32 2147483647, %v1292
    %vm1318 = vcmp.eq.f32.partialorder %v1317, 8.507059e+37
    %v1319 = vand.u32 %v1292, 2147483648
    %v1320 = vor.u32 1.1754944e-38, %v1319
    %v1321 = vsel %vm1318, %v1320, %v1316
    %v1322 = vmul.f32 %v1286, %v1321
    %v1324 = vsel %vm834, %v1307, 0
    %v1327 = vsel %vm834, %v1322, 0
    %1329 = vmatpush.msra.mxu0 0.0
    %1330 = vmatpush.msra.mxu0 0.0
    %1331 = vmatpush.msra.mxu0 0.0
    %1332 = vmatpush.msra.mxu0 0.0
    %1333 = vmatpush.msra.mxu0 0.0
    %1334 = vmatpush.msra.mxu0 0.0
    %1335 = vmatpush.msra.mxu0 0.0
    %1336 = vmatpush.msra.mxu0 0.0
    %1337 = vmatpush.msra.mxu0 0.0
    %1338 = vmatpush.msra.mxu0 0.0
    %1339 = vmatpush.msra.mxu0 0.0
    %1340 = vmatpush.msra.mxu0 0.0
    %1341 = vmatpush.msra.mxu0 0.0
    %1342 = vmatpush.msra.mxu0 0.0
    %1343 = vmatpush.msra.mxu0 %v96
    %1344 = vmatpush.msra.mxu0 %v94
    %1345 = vmatmul.f32.gmra.mxu0 %v1324
    %v1346 = vpop.f32.mrf.mxu0
    %v1347 = vadd.f32 0.0, %v1346
    %1348 = vmatmul.f32.gmra.mxu0 %v1327
    %v1349 = vpop.f32.mrf.mxu0
    %v1350 = vadd.f32 0.0, %v1349
    %1351 = vdwg.mxu0
    %v1353 = vsel %vm1247, %v1133, 0
    %v1356 = vsel %vm1247, %v1134, 0
    %1358 = vmatpush.msra.mxu0 0.0
    %1359 = vmatpush.msra.mxu0 0.0
    %1360 = vmatpush.msra.mxu0 0.0
    %1361 = vmatpush.msra.mxu0 0.0
    %1362 = vmatpush.msra.mxu0 0.0
    %1363 = vmatpush.msra.mxu0 0.0
    %1364 = vmatpush.msra.mxu0 0.0
    %1365 = vmatpush.msra.mxu0 0.0
    %1366 = vmatpush.msra.mxu0 0.0
    %1367 = vmatpush.msra.mxu0 0.0
    %1368 = vmatpush.msra.mxu0 0.0
    %1369 = vmatpush.msra.mxu0 0.0
    %1370 = vmatpush.msra.mxu0 0.0
    %1371 = vmatpush.msra.mxu0 0.0
    %1372 = vmatpush.msra.mxu0 0.0
    %1373 = vmatpush.msra.mxu0 %v1239
    %1374 = vmatmul.f32.gmra.mxu0 %v1353
    %v1375 = vpop.f32.mrf.mxu0
    %v1376 = vadd.f32 0.0, %v1375
    %1377 = vmatmul.f32.gmra.mxu0 %v1356
    %v1378 = vpop.f32.mrf.mxu0
    %v1379 = vadd.f32 0.0, %v1378
    %1380 = vdwg.mxu0
    %v1381 = vmul.f32 %v1376, 0.35355338
    %v1382 = vmul.f32 %v1379, 0.35355338
    %v1383 = vmax.f32 %v1381, -5.0
    %v1384 = vmax.f32 %v1382, -5.0
    %v1385 = vmin.f32 %v1383, 5.0
    %v1386 = vmin.f32 %v1384, 5.0
    %v1387 = vmul.f32 %v1385, 1.442695
    %v1388 = vpow.pop %v1387
    %v1389 = vmul.f32 %v1386, 1.442695
    %v1390 = vpow.pop %v1389
    %v1391 = vsel %vm834, %v1388, 0.0
    %1392 = vadd.xlane.f32.xlu0 %v1391
    %v1393 = vpop.xlane.xlu0 %1392
    %v1394 = vsel %vm834, %v1390, 0.0
    %1395 = vadd.xlane.f32.xlu0 %v1394
    %v1396 = vpop.xlane.xlu0 %1395
    %v1397 = vrcp.pop %v1393
    %v1398 = vmul.f32 %v1393, %v1397
    %v1399 = vsub.f32 1.0, %v1398
    %v1400 = vmul.f32 %v1397, %v1399
    %v1401 = vadd.f32 %v1397, %v1400
    %vm1402 = vweird.f32 %v1393
    %vm1403 = vweird.f32 %v1397
    %vm1404 = vmor %vm1402, %vm1403
    %v1405 = vsel %vm1404, %v1397, %v1401
    %v1406 = vand.u32 2147483647, %v1393
    %vm1407 = vcmp.eq.f32.partialorder %v1406, 8.507059e+37
    %v1408 = vand.u32 %v1393, 2147483648
    %v1409 = vor.u32 1.1754944e-38, %v1408
    %v1410 = vsel %vm1407, %v1409, %v1405
    %v1411 = vmul.f32 %v1388, %v1410
    %v1412 = vrcp.pop %v1396
    %v1413 = vmul.f32 %v1396, %v1412
    %v1414 = vsub.f32 1.0, %v1413
    %v1415 = vmul.f32 %v1412, %v1414
    %v1416 = vadd.f32 %v1412, %v1415
    %vm1417 = vweird.f32 %v1396
    %vm1418 = vweird.f32 %v1412
    %vm1419 = vmor %vm1417, %vm1418
    %v1420 = vsel %vm1419, %v1412, %v1416
    %v1421 = vand.u32 2147483647, %v1396
    %vm1422 = vcmp.eq.f32.partialorder %v1421, 8.507059e+37
    %v1423 = vand.u32 %v1396, 2147483648
    %v1424 = vor.u32 1.1754944e-38, %v1423
    %v1425 = vsel %vm1422, %v1424, %v1420
    %v1426 = vmul.f32 %v1390, %v1425
    %1429 = vrot.lane.b32.xlu0 %v94, 120
    %v1430 = vpop.permute.xlu0 %1429
    %1431 = vrot.lane.b32.xlu0 %v96, 120
    %v1432 = vpop.permute.xlu0 %1431
    %v1436 = vsel %vm834, %v1411, 0
    %v1439 = vsel %vm834, %v1426, 0
    %1441 = vmatpush.msra.mxu0 0.0
    %1442 = vmatpush.msra.mxu0 0.0
    %1443 = vmatpush.msra.mxu0 0.0
    %1444 = vmatpush.msra.mxu0 0.0
    %1445 = vmatpush.msra.mxu0 0.0
    %1446 = vmatpush.msra.mxu0 0.0
    %1447 = vmatpush.msra.mxu0 0.0
    %1448 = vmatpush.msra.mxu0 0.0
    %1449 = vmatpush.msra.mxu0 0.0
    %1450 = vmatpush.msra.mxu0 0.0
    %1451 = vmatpush.msra.mxu0 0.0
    %1452 = vmatpush.msra.mxu0 0.0
    %1453 = vmatpush.msra.mxu0 0.0
    %1454 = vmatpush.msra.mxu0 0.0
    %1455 = vmatpush.msra.mxu0 %v1432
    %1456 = vmatpush.msra.mxu0 %v1430
    %1457 = vmatmul.f32.gmra.mxu0 %v1436
    %v1458 = vpop.f32.mrf.mxu0
    %v1459 = vadd.f32 0.0, %v1458
    %1460 = vmatmul.f32.gmra.mxu0 %v1439
    %v1461 = vpop.f32.mrf.mxu0
    %v1462 = vadd.f32 0.0, %v1461
    %1463 = vdwg.mxu0
    %v1465 = vsel %vm1247, %v1135, 0
    %v1468 = vsel %vm1247, %v1136, 0
    %1470 = vmatpush.msra.mxu0 0.0
    %1471 = vmatpush.msra.mxu0 0.0
    %1472 = vmatpush.msra.mxu0 0.0
    %1473 = vmatpush.msra.mxu0 0.0
    %1474 = vmatpush.msra.mxu0 0.0
    %1475 = vmatpush.msra.mxu0 0.0
    %1476 = vmatpush.msra.mxu0 0.0
    %1477 = vmatpush.msra.mxu0 0.0
    %1478 = vmatpush.msra.mxu0 0.0
    %1479 = vmatpush.msra.mxu0 0.0
    %1480 = vmatpush.msra.mxu0 0.0
    %1481 = vmatpush.msra.mxu0 0.0
    %1482 = vmatpush.msra.mxu0 0.0
    %1483 = vmatpush.msra.mxu0 0.0
    %1484 = vmatpush.msra.mxu0 0.0
    %1485 = vmatpush.msra.mxu0 %v1242
    %1486 = vmatmul.f32.gmra.mxu0 %v1465
    %v1487 = vpop.f32.mrf.mxu0
    %v1488 = vadd.f32 0.0, %v1487
    %1489 = vmatmul.f32.gmra.mxu0 %v1468
    %v1490 = vpop.f32.mrf.mxu0
    %v1491 = vadd.f32 0.0, %v1490
    %1492 = vdwg.mxu0
    %v1493 = vmul.f32 %v1488, 0.35355338
    %v1494 = vmul.f32 %v1491, 0.35355338
    %v1495 = vmax.f32 %v1493, -5.0
    %v1496 = vmax.f32 %v1494, -5.0
    %v1497 = vmin.f32 %v1495, 5.0
    %v1498 = vmin.f32 %v1496, 5.0
    %v1499 = vmul.f32 %v1497, 1.442695
    %v1500 = vpow.pop %v1499
    %v1501 = vmul.f32 %v1498, 1.442695
    %v1502 = vpow.pop %v1501
    %v1503 = vsel %vm834, %v1500, 0.0
    %1504 = vadd.xlane.f32.xlu0 %v1503
    %v1505 = vpop.xlane.xlu0 %1504
    %v1506 = vsel %vm834, %v1502, 0.0
    %1507 = vadd.xlane.f32.xlu0 %v1506
    %v1508 = vpop.xlane.xlu0 %1507
    %v1509 = vrcp.pop %v1505
    %v1510 = vmul.f32 %v1505, %v1509
    %v1511 = vsub.f32 1.0, %v1510
    %v1512 = vmul.f32 %v1509, %v1511
    %v1513 = vadd.f32 %v1509, %v1512
    %vm1514 = vweird.f32 %v1505
    %vm1515 = vweird.f32 %v1509
    %vm1516 = vmor %vm1514, %vm1515
    %v1517 = vsel %vm1516, %v1509, %v1513
    %v1518 = vand.u32 2147483647, %v1505
    %vm1519 = vcmp.eq.f32.partialorder %v1518, 8.507059e+37
    %v1520 = vand.u32 %v1505, 2147483648
    %v1521 = vor.u32 1.1754944e-38, %v1520
    %v1522 = vsel %vm1519, %v1521, %v1517
    %v1523 = vmul.f32 %v1500, %v1522
    %v1524 = vrcp.pop %v1508
    %v1525 = vmul.f32 %v1508, %v1524
    %v1526 = vsub.f32 1.0, %v1525
    %v1527 = vmul.f32 %v1524, %v1526
    %v1528 = vadd.f32 %v1524, %v1527
    %vm1529 = vweird.f32 %v1508
    %vm1530 = vweird.f32 %v1524
    %vm1531 = vmor %vm1529, %vm1530
    %v1532 = vsel %vm1531, %v1524, %v1528
    %v1533 = vand.u32 2147483647, %v1508
    %vm1534 = vcmp.eq.f32.partialorder %v1533, 8.507059e+37
    %v1535 = vand.u32 %v1508, 2147483648
    %v1536 = vor.u32 1.1754944e-38, %v1535
    %v1537 = vsel %vm1534, %v1536, %v1532
    %v1538 = vmul.f32 %v1502, %v1537
    %1539 = vrot.lane.b32.xlu0 %v94, 112
    %v1540 = vpop.permute.xlu0 %1539
    %1541 = vrot.lane.b32.xlu0 %v96, 112
    %v1542 = vpop.permute.xlu0 %1541
    %v1546 = vsel %vm834, %v1523, 0
    %v1549 = vsel %vm834, %v1538, 0
    %1551 = vmatpush.msra.mxu0 0.0
    %1552 = vmatpush.msra.mxu0 0.0
    %1553 = vmatpush.msra.mxu0 0.0
    %1554 = vmatpush.msra.mxu0 0.0
    %1555 = vmatpush.msra.mxu0 0.0
    %1556 = vmatpush.msra.mxu0 0.0
    %1557 = vmatpush.msra.mxu0 0.0
    %1558 = vmatpush.msra.mxu0 0.0
    %1559 = vmatpush.msra.mxu0 0.0
    %1560 = vmatpush.msra.mxu0 0.0
    %1561 = vmatpush.msra.mxu0 0.0
    %1562 = vmatpush.msra.mxu0 0.0
    %1563 = vmatpush.msra.mxu0 0.0
    %1564 = vmatpush.msra.mxu0 0.0
    %1565 = vmatpush.msra.mxu0 %v1542
    %1566 = vmatpush.msra.mxu0 %v1540
    %1567 = vmatmul.f32.gmra.mxu0 %v1546
    %v1568 = vpop.f32.mrf.mxu0
    %v1569 = vadd.f32 0.0, %v1568
    %1570 = vmatmul.f32.gmra.mxu0 %v1549
    %v1571 = vpop.f32.mrf.mxu0
    %v1572 = vadd.f32 0.0, %v1571
    %1573 = vdwg.mxu0
    %v1575 = vsel %vm1247, %v1137, 0
    %v1578 = vsel %vm1247, %v1138, 0
    %1580 = vmatpush.msra.mxu0 0.0
    %1581 = vmatpush.msra.mxu0 0.0
    %1582 = vmatpush.msra.mxu0 0.0
    %1583 = vmatpush.msra.mxu0 0.0
    %1584 = vmatpush.msra.mxu0 0.0
    %1585 = vmatpush.msra.mxu0 0.0
    %1586 = vmatpush.msra.mxu0 0.0
    %1587 = vmatpush.msra.mxu0 0.0
    %1588 = vmatpush.msra.mxu0 0.0
    %1589 = vmatpush.msra.mxu0 0.0
    %1590 = vmatpush.msra.mxu0 0.0
    %1591 = vmatpush.msra.mxu0 0.0
    %1592 = vmatpush.msra.mxu0 0.0
    %1593 = vmatpush.msra.mxu0 0.0
    %1594 = vmatpush.msra.mxu0 0.0
    %1595 = vmatpush.msra.mxu0 %v1245
    %1596 = vmatmul.f32.gmra.mxu0 %v1575
    %v1597 = vpop.f32.mrf.mxu0
    %v1598 = vadd.f32 0.0, %v1597
    %1599 = vmatmul.f32.gmra.mxu0 %v1578
    %v1600 = vpop.f32.mrf.mxu0
    %v1601 = vadd.f32 0.0, %v1600
    %1602 = vdwg.mxu0
    %v1603 = vmul.f32 %v1598, 0.35355338
    %v1604 = vmul.f32 %v1601, 0.35355338
    %v1605 = vmax.f32 %v1603, -5.0
    %v1606 = vmax.f32 %v1604, -5.0
    %v1607 = vmin.f32 %v1605, 5.0
    %v1608 = vmin.f32 %v1606, 5.0
    %v1609 = vmul.f32 %v1607, 1.442695
    %v1610 = vpow.pop %v1609
    %v1611 = vmul.f32 %v1608, 1.442695
    %v1612 = vpow.pop %v1611
    %v1613 = vsel %vm834, %v1610, 0.0
    %1614 = vadd.xlane.f32.xlu0 %v1613
    %v1615 = vpop.xlane.xlu0 %1614
    %v1616 = vsel %vm834, %v1612, 0.0
    %1617 = vadd.xlane.f32.xlu0 %v1616
    %v1618 = vpop.xlane.xlu0 %1617
    %v1619 = vrcp.pop %v1615
    %v1620 = vmul.f32 %v1615, %v1619
    %v1621 = vsub.f32 1.0, %v1620
    %v1622 = vmul.f32 %v1619, %v1621
    %v1623 = vadd.f32 %v1619, %v1622
    %vm1624 = vweird.f32 %v1615
    %vm1625 = vweird.f32 %v1619
    %vm1626 = vmor %vm1624, %vm1625
    %v1627 = vsel %vm1626, %v1619, %v1623
    %v1628 = vand.u32 2147483647, %v1615
    %vm1629 = vcmp.eq.f32.partialorder %v1628, 8.507059e+37
    %v1630 = vand.u32 %v1615, 2147483648
    %v1631 = vor.u32 1.1754944e-38, %v1630
    %v1632 = vsel %vm1629, %v1631, %v1627
    %v1633 = vmul.f32 %v1610, %v1632
    %v1634 = vrcp.pop %v1618
    %v1635 = vmul.f32 %v1618, %v1634
    %v1636 = vsub.f32 1.0, %v1635
    %v1637 = vmul.f32 %v1634, %v1636
    %v1638 = vadd.f32 %v1634, %v1637
    %vm1639 = vweird.f32 %v1618
    %vm1640 = vweird.f32 %v1634
    %vm1641 = vmor %vm1639, %vm1640
    %v1642 = vsel %vm1641, %v1634, %v1638
    %v1643 = vand.u32 2147483647, %v1618
    %vm1644 = vcmp.eq.f32.partialorder %v1643, 8.507059e+37
    %v1645 = vand.u32 %v1618, 2147483648
    %v1646 = vor.u32 1.1754944e-38, %v1645
    %v1647 = vsel %vm1644, %v1646, %v1642
    %v1648 = vmul.f32 %v1612, %v1647
    %1649 = vrot.lane.b32.xlu0 %v94, 104
    %v1650 = vpop.permute.xlu0 %1649
    %1651 = vrot.lane.b32.xlu0 %v96, 104
    %v1652 = vpop.permute.xlu0 %1651
    %v1656 = vsel %vm834, %v1633, 0
    %v1659 = vsel %vm834, %v1648, 0
    %1661 = vmatpush.msra.mxu0 0.0
    %1662 = vmatpush.msra.mxu0 0.0
    %1663 = vmatpush.msra.mxu0 0.0
    %1664 = vmatpush.msra.mxu0 0.0
    %1665 = vmatpush.msra.mxu0 0.0
    %1666 = vmatpush.msra.mxu0 0.0
    %1667 = vmatpush.msra.mxu0 0.0
    %1668 = vmatpush.msra.mxu0 0.0
    %1669 = vmatpush.msra.mxu0 0.0
    %1670 = vmatpush.msra.mxu0 0.0
    %1671 = vmatpush.msra.mxu0 0.0
    %1672 = vmatpush.msra.mxu0 0.0
    %1673 = vmatpush.msra.mxu0 0.0
    %1674 = vmatpush.msra.mxu0 0.0
    %1675 = vmatpush.msra.mxu0 %v1652
    %1676 = vmatpush.msra.mxu0 %v1650
    %1677 = vmatmul.f32.gmra.mxu0 %v1656
    %v1678 = vpop.f32.mrf.mxu0
    %v1679 = vadd.f32 0.0, %v1678
    %1680 = vmatmul.f32.gmra.mxu0 %v1659
    %v1681 = vpop.f32.mrf.mxu0
    %v1682 = vadd.f32 0.0, %v1681
    %1683 = vdwg.mxu0
    %1686 = vrot.lane.b32.xlu0 %v1459, 8
    %v1687 = vpop.permute.xlu0 %1686
    %1688 = vrot.lane.b32.xlu0 %v1462, 8
    %v1689 = vpop.permute.xlu0 %1688
    %1694 = vrot.lane.b32.xlu0 %v1569, 16
    %v1695 = vpop.permute.xlu0 %1694
    %1696 = vrot.lane.b32.xlu0 %v1572, 16
    %v1697 = vpop.permute.xlu0 %1696
    %1702 = vrot.lane.b32.xlu0 %v1679, 24
    %v1703 = vpop.permute.xlu0 %1702
    %1704 = vrot.lane.b32.xlu0 %v1682, 24
    %v1705 = vpop.permute.xlu0 %1704
    %v1708 = vsel %vm1247, %v1347, %v1687
    %v1709 = vsel %vm1247, %v1350, %v1689
    %v1710 = vsel %vm834, %v1708, %v1695
    %v1711 = vsel %vm834, %v1709, %v1697
    %vm1712 = vcmask 195584
    %v1713 = vsel %vm1712, %v1710, %v1703
    %v1714 = vsel %vm1712, %v1711, %v1705
    %v1715 = vadd.f32 %v32, %v1713
    %v1716 = vadd.f32 %v33, %v1714
    %v1717 = vsel %vm66, %v1715, 0.0
    %v1718 = vsel %vm66, %v1716, 0.0
    %v1719 = vadd.f32 %v1717, %v1718
    %v1720 = vrot.slane %v1719, 4
    %v1721 = vadd.f32 %v1719, %v1720
    %v1722 = vrot.slane %v1721, 2
    %v1723 = vadd.f32 %v1721, %v1722
    %v1724 = vrot.slane %v1723, 1
    %v1725 = vadd.f32 %v1723, %v1724
    %v1726 = vrcp.pop 16.0
    %v1727 = vmul.f32 16.0, %v1726
    %v1728 = vsub.f32 1.0, %v1727
    %v1729 = vmul.f32 %v1726, %v1728
    %v1730 = vadd.f32 %v1726, %v1729
    %vm1731 = vweird.f32 %v1726
    %v1732 = vsel %vm1731, %v1726, %v1730
    %v1733 = vmul.f32 %v1725, %v1732
    %v1734 = vsub.f32 %v1715, %v1733
    %v1735 = vsub.f32 %v1716, %v1733
    %v1736 = vmul.f32 %v1734, %v1734
    %v1737 = vmul.f32 %v1735, %v1735
    %v1738 = vsel %vm66, %v1736, 0.0
    %v1739 = vsel %vm66, %v1737, 0.0
    %v1740 = vadd.f32 %v1738, %v1739
    %v1741 = vrot.slane %v1740, 4
    %v1742 = vadd.f32 %v1740, %v1741
    %v1743 = vrot.slane %v1742, 2
    %v1744 = vadd.f32 %v1742, %v1743
    %v1745 = vrot.slane %v1744, 1
    %v1746 = vadd.f32 %v1744, %v1745
    %v1747 = vmul.f32 %v1746, %v1732
    %v1748 = vadd.f32 %v1747, 1e-05
    %v1749 = vrsqrt.pop %v1748
    %v1750 = vmul.f32 %v1749, %v1748
    %v1751 = vmul.f32 %v1750, %v1749
    %v1752 = vmul.f32 0.5, %v1751
    %v1753 = vsub.f32 1.5, %v1752
    %v1754 = vmul.f32 %v1749, %v1753
    %vm1755 = vweird.f32 %v1748
    %vm1756 = vweird.f32 %v1749
    %vm1757 = vmor %vm1755, %vm1756
    %v1758 = vsel %vm1757, %v1749, %v1754
    %v1759 = vmul.f32 %v1734, %v1758
    %v1760 = vmul.f32 %v1735, %v1758
    %v1761 = vmul.f32 %v1759, %v55
    %v1762 = vmul.f32 %v1760, %v55
    %1764 = vrot.lane.b32.xlu0 %v55, 96
    %v1765 = vpop.permute.xlu0 %1764
    %v1767 = vadd.f32 %v1761, %v1765
    %v1768 = vadd.f32 %v1762, %v1765
    %v1769 = vpack.c.bf16 %v1768, %v1767
    %1772 = vrot.lane.b32.xlu0 %v58, 96
    %v1773 = vpop.permute.xlu0 %1772
    %1774 = vrot.lane.b32.xlu0 %v60, 96
    %v1775 = vpop.permute.xlu0 %1774
    %v1779 = vsel %vm66, %v1769, 0
    %1781 = vmatpush.bf16.msra.mxu0 0
    %1782 = vmatpush.bf16.msra.mxu0 0
    %1783 = vmatpush.bf16.msra.mxu0 0
    %1784 = vmatpush.bf16.msra.mxu0 0
    %1785 = vmatpush.bf16.msra.mxu0 0
    %1786 = vmatpush.bf16.msra.mxu0 0
    %1787 = vmatpush.bf16.msra.mxu0 %v1775
    %1788 = vmatpush.bf16.msra.mxu0 %v1773
    %1789 = vmatmul.bf16.gmra.mxu0 %v1779
    %v1790 = vpop.f32.mrf.mxu0
    %v1791 = vadd.f32 %v53, %v1790
    %v1792 = vpop.f32.mrf.mxu0
    %v1793 = vadd.f32 %v53, %v1792
    %1794 = vdwg.mxu0
    %v1795 = vmax.f32 %v1791, 0.0
    %v1796 = vmax.f32 %v1793, 0.0
    %v1797 = vpack.c.bf16 %v1796, %v1795
    %v1798 = vpack.c.bf16 %v43, %v42
    %v1799 = vpack.c.bf16 %v45, %v44
    %v1800 = vpack.c.bf16 %v47, %v46
    %v1801 = vpack.c.bf16 %v49, %v48
    %vm1802 = vcmask 523264
    %v1804 = vsel %vm1802, %v1797, 0
    %1806 = vmatpush.bf16.msra.mxu0 0
    %1807 = vmatpush.bf16.msra.mxu0 0
    %1808 = vmatpush.bf16.msra.mxu0 0
    %1809 = vmatpush.bf16.msra.mxu0 0
    %1810 = vmatpush.bf16.msra.mxu0 %v1801
    %1811 = vmatpush.bf16.msra.mxu0 %v1800
    %1812 = vmatpush.bf16.msra.mxu0 %v1799
    %1813 = vmatpush.bf16.msra.mxu0 %v1798
    %1814 = vmatmul.bf16.gmra.mxu0 %v1804
    %v1815 = vpop.f32.mrf.mxu0
    %v1816 = vadd.f32 %v54, %v1815
    %v1817 = vpop.f32.mrf.mxu0
    %v1818 = vadd.f32 %v54, %v1817
    %1819 = vdwg.mxu0
    %v1820 = vadd.f32 %v1767, %v1816
    %v1821 = vadd.f32 %v1768, %v1818
    %v1822 = vsel %vm66, %v1820, 0.0
    %v1823 = vsel %vm66, %v1821, 0.0
    %v1824 = vadd.f32 %v1822, %v1823
    %v1825 = vrot.slane %v1824, 4
    %v1826 = vadd.f32 %v1824, %v1825
    %v1827 = vrot.slane %v1826, 2
    %v1828 = vadd.f32 %v1826, %v1827
    %v1829 = vrot.slane %v1828, 1
    %v1830 = vadd.f32 %v1828, %v1829
    %v1831 = vmul.f32 %v1830, %v1732
    %v1832 = vsub.f32 %v1820, %v1831
    %v1833 = vsub.f32 %v1821, %v1831
    %v1834 = vmul.f32 %v1832, %v1832
    %v1835 = vmul.f32 %v1833, %v1833
    %v1836 = vsel %vm66, %v1834, 0.0
    %v1837 = vsel %vm66, %v1835, 0.0
    %v1838 = vadd.f32 %v1836, %v1837
    %v1839 = vrot.slane %v1838, 4
    %v1840 = vadd.f32 %v1838, %v1839
    %v1841 = vrot.slane %v1840, 2
    %v1842 = vadd.f32 %v1840, %v1841
    %v1843 = vrot.slane %v1842, 1
    %v1844 = vadd.f32 %v1842, %v1843
    %v1845 = vmul.f32 %v1844, %v1732
    %v1846 = vadd.f32 %v1845, 1e-05
    %v1847 = vrsqrt.pop %v1846
    %v1848 = vmul.f32 %v1847, %v1846
    %v1849 = vmul.f32 %v1848, %v1847
    %v1850 = vmul.f32 0.5, %v1849
    %v1851 = vsub.f32 1.5, %v1850
    %v1852 = vmul.f32 %v1847, %v1851
    %vm1853 = vweird.f32 %v1846
    %vm1854 = vweird.f32 %v1847
    %vm1855 = vmor %vm1853, %vm1854
    %v1856 = vsel %vm1855, %v1847, %v1852
    %v1857 = vmul.f32 %v1832, %v1856
    %v1858 = vmul.f32 %v1833, %v1856
    %1859 = vrot.lane.b32.xlu0 %v55, 64
    %v1860 = vpop.permute.xlu0 %1859
    %v1862 = vmul.f32 %v1857, %v1860
    %v1863 = vmul.f32 %v1858, %v1860
    %1864 = vrot.lane.b32.xlu0 %v55, 32
    %v1865 = vpop.permute.xlu0 %1864
    %v1867 = vadd.f32 %v1862, %v1865
    %v1868 = vadd.f32 %v1863, %v1865
    %1869 = vst.msk [vmem:[#allocation5] sm:$0xff] %vm66, %v1867
    %1870 = vst.msk [vmem:[#allocation5 + $0x8] sm:$0xff] %vm66, %v1868
    // Predicated region
    $region18: #{gps_layer_forward.1} parent=1 // pred_check
      _
    $region19: #{gps_layer_forward.1} parent=1 // pred_check_branch
      %1872 = sbr.rel (0) target = $region21
    $region20: #{gps_layer_forward.1} parent=1 // pred_region
      %1874 = vsyncadd [#allocation4], 0
      %s1875 = sshll.u32 [#allocation5], 4
      %s1876 = int_to_ptr.vmem [resolvable:$true] %s1875
      %s1877 = sshll.u32 %s3, 4
      %s1878 = int_to_ptr.hbm [resolvable:$true] %s1877
      %1883 = dma.vmem_to_hbm [thread:$0]  %s1876, 256, %s1878, [#allocation4], 128, 128, 8
    $region21: #{gps_layer_forward.1} parent=1 // pred_fallthru
      _
    // Predicated region
    $region22: #{gps_layer_forward.1} parent=1 // pred_check
      _
    $region23: #{gps_layer_forward.1} parent=1 // pred_check_branch
      %1885 = sbr.rel (0) target = $region25
    $region24: #{gps_layer_forward.1} parent=1 // pred_region
      %1887 = dma.done [#allocation4], 256
    $region25: #{gps_layer_forward.1} parent=1 // pred_fallthru
      _
    %1888 = vsyncpa [#allocation3], 1
    %1889 = vsyncpa [#allocation4], 1

</llo_original>
